<compile_context>
chip_gen: v7x
topology: tpu7x:2x2x1
jax: 0.10.0
libtpu: 0.0.40
codegen_flags: <defaults>
</compile_context>

<pallas_src>
import math
import functools

import jax
import jax.numpy as jnp
from jax import lax
from jax.experimental import pallas as pl
from jax.experimental.pallas import tpu as pltpu


# ---------------------------------------------------------------------------
# Kernel
# ---------------------------------------------------------------------------
def _layernorm(x, gamma, beta, eps=1e-5):
    # x: (rows, C) f32; gamma/beta: (1, C) f32  -- statistics kept in f32
    mean = jnp.mean(x, axis=-1, keepdims=True)
    var = jnp.mean((x - mean) ** 2, axis=-1, keepdims=True)
    return (x - mean) * lax.rsqrt(var + eps) * gamma + beta


def block_kernel(x_ref, ln1_g_ref, ln1_b_ref,
                 w_qkv_ref, b_qkv_ref, w_out_ref, b_out_ref,
                 ln2_g_ref, ln2_b_ref,
                 w_fc_ref, b_fc_ref, w_mproj_ref, b_mproj_ref,
                 o_ref, *, seq, n_head):
    T, H = seq, n_head
    bf16, f32 = jnp.bfloat16, jnp.float32

    x = x_ref[...]                                   # (T, C) f32, one batch per step
    C = x.shape[-1]
    hd = C // H

    # ---------------- attention branch ----------------
    ln1 = _layernorm(x, ln1_g_ref[...], ln1_b_ref[...])          # (T, C) f32

    # Fused QKV: one lane-dense matmul + one lane-dense bias add.
    # (1/sqrt(hd) is already folded into the q columns of w_qkv / b_qkv.)
    qkv = jnp.dot(ln1.astype(bf16), w_qkv_ref[...],
                  preferred_element_type=f32) + b_qkv_ref[...]   # (T, 3C) f32

    def to_heads(z):                                 # (T, C) -> (H, T, hd)
        return jnp.transpose(z.reshape(T, H, hd), (1, 0, 2))

    q = to_heads(qkv[:, 0:C])
    k = to_heads(qkv[:, C:2 * C])
    v = to_heads(qkv[:, 2 * C:3 * C])

    # Causal mask as an additive bias (finite large negative).
    row = lax.broadcasted_iota(jnp.int32, (T, T), 0)
    col = lax.broadcasted_iota(jnp.int32, (T, T), 1)
    mask_bias = jnp.where(row >= col, 0.0, -1e30).astype(f32)    # (T, T)

    dn_qk = (((2,), (2,)), ((0,), (0,)))   # (H,T,hd) x (H,T,hd) -> (H,T,T)  (no .T)
    dn_pv = (((2,), (1,)), ((0,), (0,)))   # (H,T,T)  x (H,T,hd) -> (H,T,hd)

    att = lax.dot_general(q.astype(bf16), k.astype(bf16), dn_qk,
                          preferred_element_type=f32)            # (H, T, T) f32
    att = att + mask_bias[None, :, :]
    att = att - jnp.max(att, axis=-1, keepdims=True)
    p = jnp.exp(att)
    p = p * pl.reciprocal(jnp.sum(p, axis=-1, keepdims=True), approx=True)

    y = lax.dot_general(p.astype(bf16), v.astype(bf16), dn_pv,
                        preferred_element_type=f32)              # (H, T, hd) f32

    # Reassemble heads lane-dense and run ONE K=C output projection.
    y = jnp.transpose(y, (1, 0, 2)).reshape(T, C)                # (T, C)
    attn_out = jnp.dot(y.astype(bf16), w_out_ref[...],
                       preferred_element_type=f32) + b_out_ref[...]
    x1 = x + attn_out                                            # first residual

    # ---------------- MLP branch ----------------
    ln2 = _layernorm(x1, ln2_g_ref[...], ln2_b_ref[...])
    hidden = jnp.dot(ln2.astype(bf16), w_fc_ref[...],
                     preferred_element_type=f32) + b_fc_ref[...]     # (T, 4C) f32
    # GELU, tanh approximation (matches nn.GELU(approximate='tanh')), kept in f32.
    cst = math.sqrt(2.0 / math.pi)
    hidden = 0.5 * hidden * (1.0 + jnp.tanh(cst * (hidden + 0.044715 * hidden ** 3)))
    mlp_out = jnp.dot(hidden.astype(bf16), w_mproj_ref[...],
                      preferred_element_type=f32) + b_mproj_ref[...]  # (T, C) f32

    o_ref[...] = x1 + mlp_out                                    # second residual


# ---------------------------------------------------------------------------
# Wrapper
# ---------------------------------------------------------------------------
def gpt_block(x, params, n_head):
    B, T, C = x.shape
    hd = C // n_head
    scale = 1.0 / math.sqrt(hd)
    bf16 = jnp.bfloat16

    # Fold the 1/sqrt(hd) softmax scale into the q projection (weights + bias)
    # before the bf16 cast; keep everything in the original lane-dense layout.
    w_attn = params["w_attn"]                                     # (C, 3C)
    b_attn = params["b_attn"]                                     # (1, 3C)
    w_qkv = jnp.concatenate([w_attn[:, :C] * scale, w_attn[:, C:]],
                            axis=1).astype(bf16)                  # (C, 3C) bf16
    b_qkv = jnp.concatenate([b_attn[:, :C] * scale, b_attn[:, C:]],
                            axis=1).astype(jnp.float32)           # (1, 3C) f32

    args = (
        x.reshape(B * T, C),                                      # (B*T, C)
        params["ln1_g"], params["ln1_b"],
        w_qkv, b_qkv,
        params["w_aproj"].astype(bf16), params["b_aproj"],
        params["ln2_g"], params["ln2_b"],
        params["w_fc"].astype(bf16), params["b_fc"],
        params["w_mproj"].astype(bf16), params["b_mproj"],
    )

    # x / out are tiled (T, C) per grid step (one batch element per step, rows
    # are a multiple of 8, lanes = 128 -> unmasked lane-dense stores).  All
    # parameters are full-array blocks with constant index_maps so they stay
    # resident in VMEM across grid steps.
    def full_spec(a):
        return pl.BlockSpec(a.shape, lambda b: (0,) * a.ndim)

    in_specs = ([pl.BlockSpec((T, C), lambda b: (b, 0))]
                + [full_spec(a) for a in args[1:]])

    out = pl.pallas_call(
        functools.partial(block_kernel, seq=T, n_head=n_head),
        out_shape=jax.ShapeDtypeStruct((B * T, C), jnp.float32),
        grid=(B,),
        in_specs=in_specs,
        out_specs=pl.BlockSpec((T, C), lambda b: (b, 0)),
        compiler_params=pltpu.CompilerParams(
            dimension_semantics=("parallel",)),                   # v7x: both TCs
    )(*args)
    return out.reshape(B, T, C)


# ---------------------------------------------------------------------------
# Pure-JAX references (for correctness check)
# ---------------------------------------------------------------------------
def gpt_block_ref(x, params, n_head):
    # Full f32 reference (PyTorch module semantics).
    B, T, C = x.shape
    hd = C // n_head

    def ln(z, g, b, eps=1e-5):
        m = jnp.mean(z, axis=-1, keepdims=True)
        v = jnp.mean((z - m) ** 2, axis=-1, keepdims=True)
        return (z - m) * lax.rsqrt(v + eps) * g + b

    h1 = ln(x, params["ln1_g"], params["ln1_b"])
    qkv = h1 @ params["w_attn"] + params["b_attn"]
    q, k, v = jnp.split(qkv, 3, axis=-1)
    q = q.reshape(B, T, n_head, hd).transpose(0, 2, 1, 3)
    k = k.reshape(B, T, n_head, hd).transpose(0, 2, 1, 3)
    v = v.reshape(B, T, n_head, hd).transpose(0, 2, 1, 3)
    att = jnp.einsum("bhqd,bhkd->bhqk", q, k) / math.sqrt(hd)
    mask = jnp.tril(jnp.ones((T, T), dtype=bool))
    att = jnp.where(mask, att, -jnp.inf)
    att = jax.nn.softmax(att, axis=-1)
    y = jnp.einsum("bhqk,bhkd->bhqd", att, v).transpose(0, 2, 1, 3).reshape(B, T, C)
    x1 = x + (y @ params["w_aproj"] + params["b_aproj"])

    h2 = ln(x1, params["ln2_g"], params["ln2_b"])
    hid = h2 @ params["w_fc"] + params["b_fc"]
    hid = 0.5 * hid * (1.0 + jnp.tanh(math.sqrt(2.0 / math.pi)
                                      * (hid + 0.044715 * hid ** 3)))
    return x1 + (hid @ params["w_mproj"] + params["b_mproj"])


def gpt_block_ref_mixed(x, params, n_head):
    # Same math, but with the kernel's precision choices (bf16 matmul operands,
    # f32 accumulation, f32 LN / softmax / GELU, scale folded into q projection).
    B, T, C = x.shape
    H, hd = n_head, C // n_head
    bf, f32 = jnp.bfloat16, jnp.float32
    scale = 1.0 / math.sqrt(hd)

    def ln(z, g, b, eps=1e-5):
        m = jnp.mean(z, axis=-1, keepdims=True)
        v = jnp.mean((z - m) ** 2, axis=-1, keepdims=True)
        return (z - m) * lax.rsqrt(v + eps) * g + b

    w_attn = jnp.concatenate([params["w_attn"][:, :C] * scale,
                              params["w_attn"][:, C:]], axis=1).astype(bf)
    b_attn = jnp.concatenate([params["b_attn"][:, :C] * scale,
                              params["b_attn"][:, C:]], axis=1)

    h1 = ln(x, params["ln1_g"], params["ln1_b"])
    qkv = jnp.einsum("btc,cd->btd", h1.astype(bf), w_attn,
                     preferred_element_type=f32) + b_attn
    q, k, v = jnp.split(qkv, 3, axis=-1)
    q = q.reshape(B, T, H, hd).transpose(0, 2, 1, 3)
    k = k.reshape(B, T, H, hd).transpose(0, 2, 1, 3)
    v = v.reshape(B, T, H, hd).transpose(0, 2, 1, 3)
    att = jnp.einsum("bhqd,bhkd->bhqk", q.astype(bf), k.astype(bf),
                     preferred_element_type=f32)
    mask = jnp.tril(jnp.ones((T, T), dtype=bool))
    att = jnp.where(mask, att, -1e30)
    att = jax.nn.softmax(att, axis=-1)
    y = jnp.einsum("bhqk,bhkd->bhqd", att.astype(bf), v.astype(bf),
                   preferred_element_type=f32)
    y = y.transpose(0, 2, 1, 3).reshape(B, T, C)
    x1 = x + jnp.einsum("btc,cd->btd", y.astype(bf), params["w_aproj"].astype(bf),
                        preferred_element_type=f32) + params["b_aproj"]

    h2 = ln(x1, params["ln2_g"], params["ln2_b"])
    hid = jnp.einsum("btc,cd->btd", h2.astype(bf), params["w_fc"].astype(bf),
                     preferred_element_type=f32) + params["b_fc"]
    hid = 0.5 * hid * (1.0 + jnp.tanh(math.sqrt(2.0 / math.pi)
                                      * (hid + 0.044715 * hid ** 3)))
    return x1 + jnp.einsum("btc,cd->btd", hid.astype(bf), params["w_mproj"].astype(bf),
                           preferred_element_type=f32) + params["b_mproj"]


# ---------------------------------------------------------------------------
# Main
# ---------------------------------------------------------------------------
if __name__ == "__main__":
    B, T, C, n_head = 2, 8, 128, 4   # n_embed=128, n_head=4 per the config

    key = jax.random.PRNGKey(0)
    ks = jax.random.split(key, 8)

    # Deterministic synthetic parameters. Linear weights are stored pre-transposed
    # as (in, out) so the kernel computes x @ W + b  (== PyTorch's x @ W.T + b).
    params = {
        "ln1_g": jnp.ones((1, C), jnp.float32),
        "ln1_b": jnp.zeros((1, C), jnp.float32),
        "w_attn": 0.02 * jax.random.normal(ks[0], (C, 3 * C), jnp.float32),
        "b_attn": 0.01 * jax.random.normal(ks[1], (1, 3 * C), jnp.float32),
        "w_aproj": 0.02 * jax.random.normal(ks[2], (C, C), jnp.float32),
        "b_aproj": 0.01 * jax.random.normal(ks[3], (1, C), jnp.float32),
        "ln2_g": jnp.ones((1, C), jnp.float32),
        "ln2_b": jnp.zeros((1, C), jnp.float32),
        "w_fc": 0.02 * jax.random.normal(ks[4], (C, 4 * C), jnp.float32),
        "b_fc": 0.01 * jax.random.normal(ks[5], (1, 4 * C), jnp.float32),
        # MLP c_proj weight is constant 1 in the PyTorch module (nn.init.constant_)
        "w_mproj": jnp.ones((4 * C, C), jnp.float32),
        "b_mproj": 0.01 * jax.random.normal(ks[6], (1, C), jnp.float32),
    }

    x = jax.random.normal(ks[7], (B, T, C), jnp.float32)

    out = jax.block_until_ready(gpt_block(x, params, n_head))
    assert out.shape == (B, T, C)

    # Tight-ish check against a reference using the same bf16/f32 precision choices.
    ref_mixed = jax.block_until_ready(gpt_block_ref_mixed(x, params, n_head))
    assert jnp.allclose(out, ref_mixed, atol=2e-2, rtol=2e-2), \
        "mismatch vs bf16-matched reference"

    # Looser sanity check against the exact f32 (PyTorch-semantics) reference.
    ref_f32 = jax.block_until_ready(gpt_block_ref(x, params, n_head))
    assert jnp.allclose(out, ref_f32, atol=1e-1, rtol=5e-2), \
        "mismatch vs f32 reference"

    print("KERNEL_OK")
</pallas_src>

<mosaic_0001>
module attributes {stable_mosaic.version = 11 : i64} {
  func.func @block_kernel(%arg0: i32, %arg1: memref<8x128xf32, #tpu.memory_space<vmem>>, %arg2: memref<1x128xf32, #tpu.memory_space<vmem>>, %arg3: memref<1x128xf32, #tpu.memory_space<vmem>>, %arg4: memref<128x384xbf16, #tpu.memory_space<vmem>>, %arg5: memref<1x384xf32, #tpu.memory_space<vmem>>, %arg6: memref<128x128xbf16, #tpu.memory_space<vmem>>, %arg7: memref<1x128xf32, #tpu.memory_space<vmem>>, %arg8: memref<1x128xf32, #tpu.memory_space<vmem>>, %arg9: memref<1x128xf32, #tpu.memory_space<vmem>>, %arg10: memref<128x512xbf16, #tpu.memory_space<vmem>>, %arg11: memref<1x512xf32, #tpu.memory_space<vmem>>, %arg12: memref<512x128xbf16, #tpu.memory_space<vmem>>, %arg13: memref<1x128xf32, #tpu.memory_space<vmem>>, %arg14: memref<8x128xf32, #tpu.memory_space<vmem>>) attributes {dimension_semantics = [#tpu.dimension_semantics<parallel>], iteration_bounds = array<i64: 2>, scalar_prefetch = 0 : i64, scratch_operands = 0 : i64, tpu.core_type = #tpu.core_type<tc>, window_params = [{transform_indices = @transform_0, window_bounds = array<i64: 8, 128>}, {pipeline_mode = #tpu.pipeline_mode<synchronous>, transform_indices = @transform_1, window_bounds = array<i64: 1, 128>}, {pipeline_mode = #tpu.pipeline_mode<synchronous>, transform_indices = @transform_2, window_bounds = array<i64: 1, 128>}, {pipeline_mode = #tpu.pipeline_mode<synchronous>, transform_indices = @transform_3, window_bounds = array<i64: 128, 384>}, {pipeline_mode = #tpu.pipeline_mode<synchronous>, transform_indices = @transform_4, window_bounds = array<i64: 1, 384>}, {pipeline_mode = #tpu.pipeline_mode<synchronous>, transform_indices = @transform_5, window_bounds = array<i64: 128, 128>}, {pipeline_mode = #tpu.pipeline_mode<synchronous>, transform_indices = @transform_6, window_bounds = array<i64: 1, 128>}, {pipeline_mode = #tpu.pipeline_mode<synchronous>, transform_indices = @transform_7, window_bounds = array<i64: 1, 128>}, {pipeline_mode = #tpu.pipeline_mode<synchronous>, transform_indices = @transform_8, window_bounds = array<i64: 1, 128>}, {pipeline_mode = #tpu.pipeline_mode<synchronous>, transform_indices = @transform_9, window_bounds = array<i64: 128, 512>}, {pipeline_mode = #tpu.pipeline_mode<synchronous>, transform_indices = @transform_10, window_bounds = array<i64: 1, 512>}, {pipeline_mode = #tpu.pipeline_mode<synchronous>, transform_indices = @transform_11, window_bounds = array<i64: 512, 128>}, {pipeline_mode = #tpu.pipeline_mode<synchronous>, transform_indices = @transform_12, window_bounds = array<i64: 1, 128>}, {transform_indices = @transform_13, window_bounds = array<i64: 8, 128>}]} {
    %c0 = arith.constant 0 : index
    %c0_0 = arith.constant 0 : index
    %0 = vector.load %arg1[%c0, %c0_0] : memref<8x128xf32, #tpu.memory_space<vmem>>, vector<8x128xf32>
    %c0_1 = arith.constant 0 : index
    %c0_2 = arith.constant 0 : index
    %1 = vector.load %arg2[%c0_1, %c0_2] : memref<1x128xf32, #tpu.memory_space<vmem>>, vector<1x128xf32>
    %c0_3 = arith.constant 0 : index
    %c0_4 = arith.constant 0 : index
    %2 = vector.load %arg3[%c0_3, %c0_4] : memref<1x128xf32, #tpu.memory_space<vmem>>, vector<1x128xf32>
    %cst = arith.constant dense<0.000000e+00> : vector<8xf32>
    %3 = vector.multi_reduction <add>, %0, %cst [1] : vector<8x128xf32> to vector<8xf32>
    %4 = vector.shape_cast %3 : vector<8xf32> to vector<8x1xf32>
    %cst_5 = arith.constant 1.280000e+02 : f32
    %5 = vector.broadcast %cst_5 : f32 to vector<8x1xf32>
    %6 = arith.divf %4, %5 : vector<8x1xf32>
    %7 = vector.broadcast %6 : vector<8x1xf32> to vector<8x128xf32>
    %8 = arith.subf %0, %7 : vector<8x128xf32>
    %9 = arith.mulf %8, %8 : vector<8x128xf32>
    %cst_6 = arith.constant dense<0.000000e+00> : vector<8xf32>
    %10 = vector.multi_reduction <add>, %9, %cst_6 [1] : vector<8x128xf32> to vector<8xf32>
    %11 = vector.shape_cast %10 : vector<8xf32> to vector<8x1xf32>
    %cst_7 = arith.constant 1.280000e+02 : f32
    %12 = vector.broadcast %cst_7 : f32 to vector<8x1xf32>
    %13 = arith.divf %11, %12 : vector<8x1xf32>
    %14 = vector.broadcast %6 : vector<8x1xf32> to vector<8x128xf32>
    %15 = arith.subf %0, %14 : vector<8x128xf32>
    %cst_8 = arith.constant 9.99999974E-6 : f32
    %16 = vector.broadcast %cst_8 : f32 to vector<8x1xf32>
    %17 = arith.addf %13, %16 : vector<8x1xf32>
    %18 = math.rsqrt %17 : vector<8x1xf32>
    %19 = vector.broadcast %18 : vector<8x1xf32> to vector<8x128xf32>
    %20 = arith.mulf %15, %19 : vector<8x128xf32>
    %21 = vector.broadcast %1 : vector<1x128xf32> to vector<8x128xf32>
    %22 = arith.mulf %20, %21 : vector<8x128xf32>
    %23 = vector.broadcast %2 : vector<1x128xf32> to vector<8x128xf32>
    %24 = arith.addf %22, %23 : vector<8x128xf32>
    %25 = arith.truncf %24 : vector<8x128xf32> to vector<8x128xbf16>
    %c0_9 = arith.constant 0 : index
    %c0_10 = arith.constant 0 : index
    %26 = vector.load %arg4[%c0_9, %c0_10] : memref<128x384xbf16, #tpu.memory_space<vmem>>, vector<128x384xbf16>
    %cst_11 = arith.constant dense<0.000000e+00> : vector<8x384xf32>
    %27 = tpu.matmul %25, %26, %cst_11 {dimension_numbers = #tpu.dot_dimension_numbers<[1], [0], [0], [1], [0, 0, 1, 1], [], []>} : vector<8x128xbf16>, vector<128x384xbf16>, vector<8x384xf32> -> vector<8x384xf32>
    %c0_12 = arith.constant 0 : index
    %c0_13 = arith.constant 0 : index
    %28 = vector.load %arg5[%c0_12, %c0_13] : memref<1x384xf32, #tpu.memory_space<vmem>>, vector<1x384xf32>
    %29 = vector.broadcast %28 : vector<1x384xf32> to vector<8x384xf32>
    %30 = arith.addf %27, %29 : vector<8x384xf32>
    %31 = vector.extract_strided_slice %30 {offsets = [0, 0], sizes = [8, 128], strides = [1, 1]} : vector<8x384xf32> to vector<8x128xf32>
    %32 = vector.shape_cast %31 : vector<8x128xf32> to vector<8x4x32xf32>
    %33 = tpu.transpose %32, [1, 0, 2] : vector<8x4x32xf32> -> vector<4x8x32xf32>
    %34 = vector.extract_strided_slice %30 {offsets = [0, 128], sizes = [8, 128], strides = [1, 1]} : vector<8x384xf32> to vector<8x128xf32>
    %35 = vector.shape_cast %34 : vector<8x128xf32> to vector<8x4x32xf32>
    %36 = tpu.transpose %35, [1, 0, 2] : vector<8x4x32xf32> -> vector<4x8x32xf32>
    %37 = vector.extract_strided_slice %30 {offsets = [0, 256], sizes = [8, 128], strides = [1, 1]} : vector<8x384xf32> to vector<8x128xf32>
    %38 = vector.shape_cast %37 : vector<8x128xf32> to vector<8x4x32xf32>
    %39 = tpu.transpose %38, [1, 0, 2] : vector<8x4x32xf32> -> vector<4x8x32xf32>
    %40 = tpu.iota {dimensions = array<i32: 0>} : vector<8x8xi32>
    %41 = tpu.iota {dimensions = array<i32: 1>} : vector<8x8xi32>
    %42 = arith.cmpi sge, %40, %41 : vector<8x8xi32>
    %cst_14 = arith.constant 0.000000e+00 : f32
    %cst_15 = arith.constant -1.000000e+30 : f32
    %43 = vector.broadcast %cst_14 : f32 to vector<8x8xf32>
    %44 = vector.broadcast %cst_15 : f32 to vector<8x8xf32>
    %45 = arith.select %42, %43, %44 : vector<8x8xi1>, vector<8x8xf32>
    %46 = arith.truncf %33 : vector<4x8x32xf32> to vector<4x8x32xbf16>
    %47 = arith.truncf %36 : vector<4x8x32xf32> to vector<4x8x32xbf16>
    %cst_16 = arith.constant dense<0.000000e+00> : vector<4x8x8xf32>
    %48 = tpu.matmul %46, %47, %cst_16 {dimension_numbers = #tpu.dot_dimension_numbers<[2], [2], [1], [1], [0, 0, 0, 1, 1, 1], [0], [0]>} : vector<4x8x32xbf16>, vector<4x8x32xbf16>, vector<4x8x8xf32> -> vector<4x8x8xf32>
    %49 = vector.shape_cast %45 : vector<8x8xf32> to vector<1x8x8xf32>
    %50 = vector.broadcast %49 : vector<1x8x8xf32> to vector<4x8x8xf32>
    %51 = arith.addf %48, %50 : vector<4x8x8xf32>
    %cst_17 = arith.constant dense<0xFF800000> : vector<4x8xf32>
    %52 = vector.multi_reduction <maximumf>, %51, %cst_17 [2] : vector<4x8x8xf32> to vector<4x8xf32>
    %53 = vector.shape_cast %52 : vector<4x8xf32> to vector<4x8x1xf32>
    %54 = vector.broadcast %53 : vector<4x8x1xf32> to vector<4x8x8xf32>
    %55 = arith.subf %51, %54 : vector<4x8x8xf32>
    %56 = math.exp %55 : vector<4x8x8xf32>
    %cst_18 = arith.constant dense<0.000000e+00> : vector<4x8xf32>
    %57 = vector.multi_reduction <add>, %56, %cst_18 [2] : vector<4x8x8xf32> to vector<4x8xf32>
    %58 = vector.shape_cast %57 : vector<4x8xf32> to vector<4x8x1xf32>
    %59 = tpu.reciprocal %58 {approx = true} : vector<4x8x1xf32> -> vector<4x8x1xf32>
    %60 = vector.broadcast %59 : vector<4x8x1xf32> to vector<4x8x8xf32>
    %61 = arith.mulf %56, %60 : vector<4x8x8xf32>
    %62 = arith.truncf %61 : vector<4x8x8xf32> to vector<4x8x8xbf16>
    %63 = arith.truncf %39 : vector<4x8x32xf32> to vector<4x8x32xbf16>
    %cst_19 = arith.constant dense<0.000000e+00> : vector<4x8x32xf32>
    %64 = tpu.matmul %62, %63, %cst_19 {dimension_numbers = #tpu.dot_dimension_numbers<[2], [1], [1], [2], [0, 0, 0, 1, 1, 2], [0], [0]>} : vector<4x8x8xbf16>, vector<4x8x32xbf16>, vector<4x8x32xf32> -> vector<4x8x32xf32>
    %65 = tpu.transpose %64, [1, 0, 2] : vector<4x8x32xf32> -> vector<8x4x32xf32>
    %66 = vector.shape_cast %65 : vector<8x4x32xf32> to vector<8x128xf32>
    %67 = arith.truncf %66 : vector<8x128xf32> to vector<8x128xbf16>
    %c0_20 = arith.constant 0 : index
    %c0_21 = arith.constant 0 : index
    %68 = vector.load %arg6[%c0_20, %c0_21] : memref<128x128xbf16, #tpu.memory_space<vmem>>, vector<128x128xbf16>
    %cst_22 = arith.constant dense<0.000000e+00> : vector<8x128xf32>
    %69 = tpu.matmul %67, %68, %cst_22 {dimension_numbers = #tpu.dot_dimension_numbers<[1], [0], [0], [1], [0, 0, 1, 1], [], []>} : vector<8x128xbf16>, vector<128x128xbf16>, vector<8x128xf32> -> vector<8x128xf32>
    %c0_23 = arith.constant 0 : index
    %c0_24 = arith.constant 0 : index
    %70 = vector.load %arg7[%c0_23, %c0_24] : memref<1x128xf32, #tpu.memory_space<vmem>>, vector<1x128xf32>
    %71 = vector.broadcast %70 : vector<1x128xf32> to vector<8x128xf32>
    %72 = arith.addf %69, %71 : vector<8x128xf32>
    %73 = arith.addf %0, %72 : vector<8x128xf32>
    %c0_25 = arith.constant 0 : index
    %c0_26 = arith.constant 0 : index
    %74 = vector.load %arg8[%c0_25, %c0_26] : memref<1x128xf32, #tpu.memory_space<vmem>>, vector<1x128xf32>
    %c0_27 = arith.constant 0 : index
    %c0_28 = arith.constant 0 : index
    %75 = vector.load %arg9[%c0_27, %c0_28] : memref<1x128xf32, #tpu.memory_space<vmem>>, vector<1x128xf32>
    %cst_29 = arith.constant dense<0.000000e+00> : vector<8xf32>
    %76 = vector.multi_reduction <add>, %73, %cst_29 [1] : vector<8x128xf32> to vector<8xf32>
    %77 = vector.shape_cast %76 : vector<8xf32> to vector<8x1xf32>
    %cst_30 = arith.constant 1.280000e+02 : f32
    %78 = vector.broadcast %cst_30 : f32 to vector<8x1xf32>
    %79 = arith.divf %77, %78 : vector<8x1xf32>
    %80 = vector.broadcast %79 : vector<8x1xf32> to vector<8x128xf32>
    %81 = arith.subf %73, %80 : vector<8x128xf32>
    %82 = arith.mulf %81, %81 : vector<8x128xf32>
    %cst_31 = arith.constant dense<0.000000e+00> : vector<8xf32>
    %83 = vector.multi_reduction <add>, %82, %cst_31 [1] : vector<8x128xf32> to vector<8xf32>
    %84 = vector.shape_cast %83 : vector<8xf32> to vector<8x1xf32>
    %cst_32 = arith.constant 1.280000e+02 : f32
    %85 = vector.broadcast %cst_32 : f32 to vector<8x1xf32>
    %86 = arith.divf %84, %85 : vector<8x1xf32>
    %87 = vector.broadcast %79 : vector<8x1xf32> to vector<8x128xf32>
    %88 = arith.subf %73, %87 : vector<8x128xf32>
    %cst_33 = arith.constant 9.99999974E-6 : f32
    %89 = vector.broadcast %cst_33 : f32 to vector<8x1xf32>
    %90 = arith.addf %86, %89 : vector<8x1xf32>
    %91 = math.rsqrt %90 : vector<8x1xf32>
    %92 = vector.broadcast %91 : vector<8x1xf32> to vector<8x128xf32>
    %93 = arith.mulf %88, %92 : vector<8x128xf32>
    %94 = vector.broadcast %74 : vector<1x128xf32> to vector<8x128xf32>
    %95 = arith.mulf %93, %94 : vector<8x128xf32>
    %96 = vector.broadcast %75 : vector<1x128xf32> to vector<8x128xf32>
    %97 = arith.addf %95, %96 : vector<8x128xf32>
    %98 = arith.truncf %97 : vector<8x128xf32> to vector<8x128xbf16>
    %c0_34 = arith.constant 0 : index
    %c0_35 = arith.constant 0 : index
    %99 = vector.load %arg10[%c0_34, %c0_35] : memref<128x512xbf16, #tpu.memory_space<vmem>>, vector<128x512xbf16>
    %cst_36 = arith.constant dense<0.000000e+00> : vector<8x512xf32>
    %100 = tpu.matmul %98, %99, %cst_36 {dimension_numbers = #tpu.dot_dimension_numbers<[1], [0], [0], [1], [0, 0, 1, 1], [], []>} : vector<8x128xbf16>, vector<128x512xbf16>, vector<8x512xf32> -> vector<8x512xf32>
    %c0_37 = arith.constant 0 : index
    %c0_38 = arith.constant 0 : index
    %101 = vector.load %arg11[%c0_37, %c0_38] : memref<1x512xf32, #tpu.memory_space<vmem>>, vector<1x512xf32>
    %102 = vector.broadcast %101 : vector<1x512xf32> to vector<8x512xf32>
    %103 = arith.addf %100, %102 : vector<8x512xf32>
    %cst_39 = arith.constant 5.000000e-01 : f32
    %104 = vector.broadcast %cst_39 : f32 to vector<8x512xf32>
    %105 = arith.mulf %104, %103 : vector<8x512xf32>
    %106 = arith.mulf %103, %103 : vector<8x512xf32>
    %107 = arith.mulf %103, %106 : vector<8x512xf32>
    %cst_40 = arith.constant 4.471500e-02 : f32
    %108 = vector.broadcast %cst_40 : f32 to vector<8x512xf32>
    %109 = arith.mulf %108, %107 : vector<8x512xf32>
    %110 = arith.addf %103, %109 : vector<8x512xf32>
    %cst_41 = arith.constant 0.797884583 : f32
    %111 = vector.broadcast %cst_41 : f32 to vector<8x512xf32>
    %112 = arith.mulf %111, %110 : vector<8x512xf32>
    %113 = math.tanh %112 : vector<8x512xf32>
    %cst_42 = arith.constant 1.000000e+00 : f32
    %114 = vector.broadcast %cst_42 : f32 to vector<8x512xf32>
    %115 = arith.addf %114, %113 : vector<8x512xf32>
    %116 = arith.mulf %105, %115 : vector<8x512xf32>
    %117 = arith.truncf %116 : vector<8x512xf32> to vector<8x512xbf16>
    %c0_43 = arith.constant 0 : index
    %c0_44 = arith.constant 0 : index
    %118 = vector.load %arg12[%c0_43, %c0_44] : memref<512x128xbf16, #tpu.memory_space<vmem>>, vector<512x128xbf16>
    %cst_45 = arith.constant dense<0.000000e+00> : vector<8x128xf32>
    %119 = tpu.matmul %117, %118, %cst_45 {dimension_numbers = #tpu.dot_dimension_numbers<[1], [0], [0], [1], [0, 0, 1, 1], [], []>} : vector<8x512xbf16>, vector<512x128xbf16>, vector<8x128xf32> -> vector<8x128xf32>
    %c0_46 = arith.constant 0 : index
    %c0_47 = arith.constant 0 : index
    %120 = vector.load %arg13[%c0_46, %c0_47] : memref<1x128xf32, #tpu.memory_space<vmem>>, vector<1x128xf32>
    %121 = vector.broadcast %120 : vector<1x128xf32> to vector<8x128xf32>
    %122 = arith.addf %119, %121 : vector<8x128xf32>
    %123 = arith.addf %73, %122 : vector<8x128xf32>
    %c0_48 = arith.constant 0 : index
    %c0_49 = arith.constant 0 : index
    %124 = vector.load %arg14[%c0_48, %c0_49] : memref<8x128xf32, #tpu.memory_space<vmem>>, vector<8x128xf32>
    tpu.vector_store %arg14[%c0_48, %c0_49], %123 {strides = array<i32>} : memref<8x128xf32, #tpu.memory_space<vmem>>, vector<8x128xf32>,
    return
  }
  func.func @transform_0(%arg0: i32) -> (i32, i32) {
    %c0_i32 = arith.constant 0 : i32
    %c0_i32_0 = arith.constant 0 : i32
    return %arg0, %c0_i32 : i32, i32
  }
  func.func @transform_1(%arg0: i32) -> (i32, i32) {
    %c0_i32 = arith.constant 0 : i32
    %c0_i32_0 = arith.constant 0 : i32
    %c0_i32_1 = arith.constant 0 : i32
    return %c0_i32, %c0_i32_0 : i32, i32
  }
  func.func @transform_2(%arg0: i32) -> (i32, i32) {
    %c0_i32 = arith.constant 0 : i32
    %c0_i32_0 = arith.constant 0 : i32
    %c0_i32_1 = arith.constant 0 : i32
    return %c0_i32, %c0_i32_0 : i32, i32
  }
  func.func @transform_3(%arg0: i32) -> (i32, i32) {
    %c0_i32 = arith.constant 0 : i32
    %c0_i32_0 = arith.constant 0 : i32
    %c0_i32_1 = arith.constant 0 : i32
    return %c0_i32, %c0_i32_0 : i32, i32
  }
  func.func @transform_4(%arg0: i32) -> (i32, i32) {
    %c0_i32 = arith.constant 0 : i32
    %c0_i32_0 = arith.constant 0 : i32
    %c0_i32_1 = arith.constant 0 : i32
    return %c0_i32, %c0_i32_0 : i32, i32
  }
  func.func @transform_5(%arg0: i32) -> (i32, i32) {
    %c0_i32 = arith.constant 0 : i32
    %c0_i32_0 = arith.constant 0 : i32
    %c0_i32_1 = arith.constant 0 : i32
    return %c0_i32, %c0_i32_0 : i32, i32
  }
  func.func @transform_6(%arg0: i32) -> (i32, i32) {
    %c0_i32 = arith.constant 0 : i32
    %c0_i32_0 = arith.constant 0 : i32
    %c0_i32_1 = arith.constant 0 : i32
    return %c0_i32, %c0_i32_0 : i32, i32
  }
  func.func @transform_7(%arg0: i32) -> (i32, i32) {
    %c0_i32 = arith.constant 0 : i32
    %c0_i32_0 = arith.constant 0 : i32
    %c0_i32_1 = arith.constant 0 : i32
    return %c0_i32, %c0_i32_0 : i32, i32
  }
  func.func @transform_8(%arg0: i32) -> (i32, i32) {
    %c0_i32 = arith.constant 0 : i32
    %c0_i32_0 = arith.constant 0 : i32
    %c0_i32_1 = arith.constant 0 : i32
    return %c0_i32, %c0_i32_0 : i32, i32
  }
  func.func @transform_9(%arg0: i32) -> (i32, i32) {
    %c0_i32 = arith.constant 0 : i32
    %c0_i32_0 = arith.constant 0 : i32
    %c0_i32_1 = arith.constant 0 : i32
    return %c0_i32, %c0_i32_0 : i32, i32
  }
  func.func @transform_10(%arg0: i32) -> (i32, i32) {
    %c0_i32 = arith.constant 0 : i32
    %c0_i32_0 = arith.constant 0 : i32
    %c0_i32_1 = arith.constant 0 : i32
    return %c0_i32, %c0_i32_0 : i32, i32
  }
  func.func @transform_11(%arg0: i32) -> (i32, i32) {
    %c0_i32 = arith.constant 0 : i32
    %c0_i32_0 = arith.constant 0 : i32
    %c0_i32_1 = arith.constant 0 : i32
    return %c0_i32, %c0_i32_0 : i32, i32
  }
  func.func @transform_12(%arg0: i32) -> (i32, i32) {
    %c0_i32 = arith.constant 0 : i32
    %c0_i32_0 = arith.constant 0 : i32
    %c0_i32_1 = arith.constant 0 : i32
    return %c0_i32, %c0_i32_0 : i32, i32
  }
  func.func @transform_13(%arg0: i32) -> (i32, i32) {
    %c0_i32 = arith.constant 0 : i32
    %c0_i32_0 = arith.constant 0 : i32
    return %arg0, %c0_i32 : i32, i32
  }
}

</mosaic_0001>

<llo_original>
// kernel: tpu_custom_call.1
$region0: #{tpu_custom_call.1}
  #allocation0 [shape = 'u32[]', space=smem, size = 0x4, offset = 0x4, fixed_abs, tag = 'smem constant byte address 0x4 - core index']
  #allocation1 [shape = 'u32[144,128]{1,0:T(1,128)}', space=vmem, size = 0x12000, scoped, tag = 'internal scratch']
  %s0 = inlined_call_operand.hbm [shape: f32[16,128], index: 0, kind: input, shape index: {}]
  %s1 = inlined_call_operand.hbm [shape: f32[1,128], index: 1, kind: input, shape index: {}]
  %s2 = inlined_call_operand.hbm [shape: f32[1,128], index: 2, kind: input, shape index: {}]
  %s3 = inlined_call_operand.hbm [shape: bf16[128,384], index: 3, kind: input, shape index: {}]
  %s4 = inlined_call_operand.vmem [shape: f32[1,384], index: 4, kind: input, shape index: {}]
  %s5 = inlined_call_operand.hbm [shape: bf16[128,128], index: 5, kind: input, shape index: {}]
  %s6 = inlined_call_operand.vmem [shape: f32[1,128], index: 6, kind: input, shape index: {}]
  %s7 = inlined_call_operand.vmem [shape: f32[1,128], index: 7, kind: input, shape index: {}]
  %s8 = inlined_call_operand.vmem [shape: f32[1,128], index: 8, kind: input, shape index: {}]
  %s9 = inlined_call_operand.hbm [shape: bf16[128,512], index: 9, kind: input, shape index: {}]
  %s10 = inlined_call_operand.vmem [shape: f32[1,512], index: 10, kind: input, shape index: {}]
  %s11 = inlined_call_operand.hbm [shape: bf16[512,128], index: 11, kind: input, shape index: {}]
  %s12 = inlined_call_operand.vmem [shape: f32[1,128], index: 12, kind: input, shape index: {}]
  %s13 = inlined_call_operand.hbm [shape: f32[16,128], index: 13, kind: output, shape index: {}]
  %s14 = sld [smem:[#allocation0]]
  $region113: #{tpu_custom_call.1} parent=0
    _
  %s16 = ssub.s32 1, %s14
  %s17 = scalar_select 0, %s16, %s14
  $region1: #{tpu_custom_call.1} parent=0
    #allocation2 [shape = 'u8[8192]{0}', space=vmem, size = 0x2000, scoped, tag = 'input window, operand 0']
    #allocation3 [shape = 's32[2]{0}', space=sflag, size = 0x8, scoped, tag = 'scoped memory for tpu_custom_call.1']
    #allocation4 [shape = 's32[2]{0}', space=sflag, size = 0x8, scoped, tag = 'scoped memory for tpu_custom_call.1']
    #allocation5 [shape = 'u8[512]{0}', space=vmem, size = 0x400, scoped, tag = 'input window, operand 1, single buffered']
    #allocation6 [shape = 's32[1]{0}', space=sflag, size = 0x4, scoped, tag = 'scoped memory for tpu_custom_call.1']
    #allocation7 [shape = 'u8[512]{0}', space=vmem, size = 0x400, scoped, tag = 'input window, operand 2, single buffered']
    #allocation8 [shape = 'u8[98304]{0}', space=vmem, size = 0x18000, scoped, tag = 'input window, operand 3, single buffered']
    #allocation9 [shape = 's32[1]{0}', space=sflag, size = 0x4, scoped, tag = 'scoped memory for tpu_custom_call.1']
    #allocation10 [shape = 'u8[32768]{0}', space=vmem, size = 0x8000, scoped, tag = 'input window, operand 5, single buffered']
    #allocation11 [shape = 'u8[131072]{0}', space=vmem, size = 0x20000, scoped, tag = 'input window, operand 9, single buffered']
    #allocation12 [shape = 's32[1]{0}', space=sflag, size = 0x4, scoped, tag = 'scoped memory for tpu_custom_call.1']
    #allocation13 [shape = 'u8[131072]{0}', space=vmem, size = 0x20000, scoped, tag = 'input window, operand 11, single buffered']
    #allocation14 [shape = 'u8[8192]{0}', space=vmem, size = 0x2000, scoped, tag = 'output window, operand 0']
    %18 = vsyncpa [#allocation3], 0
    %s19 = scalar_lea.sflag [#allocation3], 1
    %20 = vsyncpa %s19, 0
    %21 = vsyncpa [#allocation6], 0
    %22 = vsyncpa [#allocation9], 0
    %23 = vsyncpa [#allocation12], 0
    %24 = vsyncpa [#allocation4], 0
    %s25 = scalar_lea.sflag [#allocation4], 1
    %26 = vsyncpa %s25, 0
    loop: start=0, step=1, limit=4
    $region2: #{tpu_custom_call.1} parent=1 // loop_pre_header
      _
    $region3: #{tpu_custom_call.1} parent=1 // loop_header
      %s28 = sphi 0, %s32
      %p29 = scmp.ge.s32.totalorder %s28, 4
      %s38 = sphi 0, %s40
      %s41 = sphi 0, %s38
      %s42 = sphi 0, %s41
      %s58 = sphi 0, %s42
      %s62 = sphi 0, %s62
      %s64 = sphi 0, %s62
      %s65 = sphi 0, %s64
      %s79 = sphi 0, %s65
      %s83 = sphi 0, %s83
      %s85 = sphi 0, %s83
      %s86 = sphi 0, %s85
      %s100 = sphi 0, %s86
      %s104 = sphi 0, %s104
      %s106 = sphi 0, %s104
      %s107 = sphi 0, %s106
      %s121 = sphi 0, %s107
      %s125 = sphi 0, %s125
      %s127 = sphi 0, %s125
      %s128 = sphi 0, %s127
      %s142 = sphi 0, %s128
      %s146 = sphi 0, %s146
      %s148 = sphi 0, %s146
      %s149 = sphi 0, %s148
      %s163 = sphi 0, %s149
      %s167 = sphi 0, %s167
      %s169 = sphi 0, %s167
      %s170 = sphi 0, %s169
      %s184 = sphi 0, %s170
      %s188 = sphi 0, %s188
      %s190 = sphi 0, %s188
      %s191 = sphi 0, %s190
      %s205 = sphi 0, %s191
      %s209 = sphi 0, %s209
      %s211 = sphi 0, %s209
      %s212 = sphi 0, %s211
      %s226 = sphi 0, %s212
      %s230 = sphi 0, %s230
      %s232 = sphi 0, %s230
      %s233 = sphi 0, %s232
      %s247 = sphi 0, %s233
      %s251 = sphi 0, %s251
      %s253 = sphi 0, %s251
      %s254 = sphi 0, %s253
      %s268 = sphi 0, %s254
      %s272 = sphi 0, %s272
      %s274 = sphi 0, %s272
      %s275 = sphi 0, %s274
      %s289 = sphi 0, %s275
      %s293 = sphi 0, %s293
      %s295 = sphi 0, %s293
      %s296 = sphi 0, %s295
      %s310 = sphi 0, %s296
      %s316 = sphi 0, %s318
      %s319 = sphi 0, %s316
      %s320 = sphi 0, %s319
      %s336 = sphi 0, %s320
    $region4: #{tpu_custom_call.1} parent=1 // loop_header_branch
      %31 = sbr.rel (%p29) target = $region8
    $region5: #{tpu_custom_call.1} parent=1 // loop_body
      %s33 = ssub.s32 %s28, 1
      %s34 = ssub.s32 %s28, 2
      %s35 = sadd.s32 %s28, 1
      %s36 = ssub.s32 %s28, %s35
      %p37 = scmp.eq.s32.totalorder %s36, 0
      %s39 = sadd.s32 %s38, 1
      %s40 = scalar_select %p37, %s38, %s39
      %p43 = pneg %p37
      %p44 = scmp.eq.s32.totalorder %s28, 1
      %p45 = por %p43, %p44
      %p46 = scmp.ne.s32.totalorder %s38, %s41
      %p47 = scmp.eq.s32.totalorder %s28, 0
      %p48 = por %p46, %p47
      %p49 = scmp.ne.s32.totalorder %s38, %s41
      %p50 = scmp.eq.s32.totalorder %s33, 1
      %p51 = por %p49, %p50
      %p52 = scmp.ne.s32.totalorder %s41, %s42
      %p53 = scmp.eq.s32.totalorder %s33, 0
      %p54 = por %p52, %p53
      %p55 = scmp.ne.s32.totalorder %s41, %s42
      %p56 = scmp.eq.s32.totalorder %s34, 1
      %p57 = por %p55, %p56
      %p59 = scmp.ne.s32.totalorder %s42, %s58
      %p60 = scmp.eq.s32.totalorder %s34, 0
      %p61 = por %p59, %p60
      %s63 = sadd.s32 %s62, 1
      %p66 = scmp.eq.s32.totalorder %s28, 1
      %p67 = scmp.ne.s32.totalorder %s62, %s64
      %p68 = scmp.eq.s32.totalorder %s28, 0
      %p69 = por %p67, %p68
      %p70 = scmp.ne.s32.totalorder %s62, %s64
      %p71 = scmp.eq.s32.totalorder %s33, 1
      %p72 = por %p70, %p71
      %p73 = scmp.ne.s32.totalorder %s64, %s65
      %p74 = scmp.eq.s32.totalorder %s33, 0
      %p75 = por %p73, %p74
      %p76 = scmp.ne.s32.totalorder %s64, %s65
      %p77 = scmp.eq.s32.totalorder %s34, 1
      %p78 = por %p76, %p77
      %p80 = scmp.ne.s32.totalorder %s65, %s79
      %p81 = scmp.eq.s32.totalorder %s34, 0
      %p82 = por %p80, %p81
      %s84 = sadd.s32 %s83, 1
      %p87 = scmp.eq.s32.totalorder %s28, 1
      %p88 = scmp.ne.s32.totalorder %s83, %s85
      %p89 = scmp.eq.s32.totalorder %s28, 0
      %p90 = por %p88, %p89
      %p91 = scmp.ne.s32.totalorder %s83, %s85
      %p92 = scmp.eq.s32.totalorder %s33, 1
      %p93 = por %p91, %p92
      %p94 = scmp.ne.s32.totalorder %s85, %s86
      %p95 = scmp.eq.s32.totalorder %s33, 0
      %p96 = por %p94, %p95
      %p97 = scmp.ne.s32.totalorder %s85, %s86
      %p98 = scmp.eq.s32.totalorder %s34, 1
      %p99 = por %p97, %p98
      %p101 = scmp.ne.s32.totalorder %s86, %s100
      %p102 = scmp.eq.s32.totalorder %s34, 0
      %p103 = por %p101, %p102
      %s105 = sadd.s32 %s104, 1
      %p108 = scmp.eq.s32.totalorder %s28, 1
      %p109 = scmp.ne.s32.totalorder %s104, %s106
      %p110 = scmp.eq.s32.totalorder %s28, 0
      %p111 = por %p109, %p110
      %p112 = scmp.ne.s32.totalorder %s104, %s106
      %p113 = scmp.eq.s32.totalorder %s33, 1
      %p114 = por %p112, %p113
      %p115 = scmp.ne.s32.totalorder %s106, %s107
      %p116 = scmp.eq.s32.totalorder %s33, 0
      %p117 = por %p115, %p116
      %p118 = scmp.ne.s32.totalorder %s106, %s107
      %p119 = scmp.eq.s32.totalorder %s34, 1
      %p120 = por %p118, %p119
      %p122 = scmp.ne.s32.totalorder %s107, %s121
      %p123 = scmp.eq.s32.totalorder %s34, 0
      %p124 = por %p122, %p123
      %s126 = sadd.s32 %s125, 1
      %p129 = scmp.eq.s32.totalorder %s28, 1
      %p130 = scmp.ne.s32.totalorder %s125, %s127
      %p131 = scmp.eq.s32.totalorder %s28, 0
      %p132 = por %p130, %p131
      %p133 = scmp.ne.s32.totalorder %s125, %s127
      %p134 = scmp.eq.s32.totalorder %s33, 1
      %p135 = por %p133, %p134
      %p136 = scmp.ne.s32.totalorder %s127, %s128
      %p137 = scmp.eq.s32.totalorder %s33, 0
      %p138 = por %p136, %p137
      %p139 = scmp.ne.s32.totalorder %s127, %s128
      %p140 = scmp.eq.s32.totalorder %s34, 1
      %p141 = por %p139, %p140
      %p143 = scmp.ne.s32.totalorder %s128, %s142
      %p144 = scmp.eq.s32.totalorder %s34, 0
      %p145 = por %p143, %p144
      %s147 = sadd.s32 %s146, 1
      %p150 = scmp.eq.s32.totalorder %s28, 1
      %p151 = scmp.ne.s32.totalorder %s146, %s148
      %p152 = scmp.eq.s32.totalorder %s28, 0
      %p153 = por %p151, %p152
      %p154 = scmp.ne.s32.totalorder %s146, %s148
      %p155 = scmp.eq.s32.totalorder %s33, 1
      %p156 = por %p154, %p155
      %p157 = scmp.ne.s32.totalorder %s148, %s149
      %p158 = scmp.eq.s32.totalorder %s33, 0
      %p159 = por %p157, %p158
      %p160 = scmp.ne.s32.totalorder %s148, %s149
      %p161 = scmp.eq.s32.totalorder %s34, 1
      %p162 = por %p160, %p161
      %p164 = scmp.ne.s32.totalorder %s149, %s163
      %p165 = scmp.eq.s32.totalorder %s34, 0
      %p166 = por %p164, %p165
      %s168 = sadd.s32 %s167, 1
      %p171 = scmp.eq.s32.totalorder %s28, 1
      %p172 = scmp.ne.s32.totalorder %s167, %s169
      %p173 = scmp.eq.s32.totalorder %s28, 0
      %p174 = por %p172, %p173
      %p175 = scmp.ne.s32.totalorder %s167, %s169
      %p176 = scmp.eq.s32.totalorder %s33, 1
      %p177 = por %p175, %p176
      %p178 = scmp.ne.s32.totalorder %s169, %s170
      %p179 = scmp.eq.s32.totalorder %s33, 0
      %p180 = por %p178, %p179
      %p181 = scmp.ne.s32.totalorder %s169, %s170
      %p182 = scmp.eq.s32.totalorder %s34, 1
      %p183 = por %p181, %p182
      %p185 = scmp.ne.s32.totalorder %s170, %s184
      %p186 = scmp.eq.s32.totalorder %s34, 0
      %p187 = por %p185, %p186
      %s189 = sadd.s32 %s188, 1
      %p192 = scmp.eq.s32.totalorder %s28, 1
      %p193 = scmp.ne.s32.totalorder %s188, %s190
      %p194 = scmp.eq.s32.totalorder %s28, 0
      %p195 = por %p193, %p194
      %p196 = scmp.ne.s32.totalorder %s188, %s190
      %p197 = scmp.eq.s32.totalorder %s33, 1
      %p198 = por %p196, %p197
      %p199 = scmp.ne.s32.totalorder %s190, %s191
      %p200 = scmp.eq.s32.totalorder %s33, 0
      %p201 = por %p199, %p200
      %p202 = scmp.ne.s32.totalorder %s190, %s191
      %p203 = scmp.eq.s32.totalorder %s34, 1
      %p204 = por %p202, %p203
      %p206 = scmp.ne.s32.totalorder %s191, %s205
      %p207 = scmp.eq.s32.totalorder %s34, 0
      %p208 = por %p206, %p207
      %s210 = sadd.s32 %s209, 1
      %p213 = scmp.eq.s32.totalorder %s28, 1
      %p214 = scmp.ne.s32.totalorder %s209, %s211
      %p215 = scmp.eq.s32.totalorder %s28, 0
      %p216 = por %p214, %p215
      %p217 = scmp.ne.s32.totalorder %s209, %s211
      %p218 = scmp.eq.s32.totalorder %s33, 1
      %p219 = por %p217, %p218
      %p220 = scmp.ne.s32.totalorder %s211, %s212
      %p221 = scmp.eq.s32.totalorder %s33, 0
      %p222 = por %p220, %p221
      %p223 = scmp.ne.s32.totalorder %s211, %s212
      %p224 = scmp.eq.s32.totalorder %s34, 1
      %p225 = por %p223, %p224
      %p227 = scmp.ne.s32.totalorder %s212, %s226
      %p228 = scmp.eq.s32.totalorder %s34, 0
      %p229 = por %p227, %p228
      %s231 = sadd.s32 %s230, 1
      %p234 = scmp.eq.s32.totalorder %s28, 1
      %p235 = scmp.ne.s32.totalorder %s230, %s232
      %p236 = scmp.eq.s32.totalorder %s28, 0
      %p237 = por %p235, %p236
      %p238 = scmp.ne.s32.totalorder %s230, %s232
      %p239 = scmp.eq.s32.totalorder %s33, 1
      %p240 = por %p238, %p239
      %p241 = scmp.ne.s32.totalorder %s232, %s233
      %p242 = scmp.eq.s32.totalorder %s33, 0
      %p243 = por %p241, %p242
      %p244 = scmp.ne.s32.totalorder %s232, %s233
      %p245 = scmp.eq.s32.totalorder %s34, 1
      %p246 = por %p244, %p245
      %p248 = scmp.ne.s32.totalorder %s233, %s247
      %p249 = scmp.eq.s32.totalorder %s34, 0
      %p250 = por %p248, %p249
      %s252 = sadd.s32 %s251, 1
      %p255 = scmp.eq.s32.totalorder %s28, 1
      %p256 = scmp.ne.s32.totalorder %s251, %s253
      %p257 = scmp.eq.s32.totalorder %s28, 0
      %p258 = por %p256, %p257
      %p259 = scmp.ne.s32.totalorder %s251, %s253
      %p260 = scmp.eq.s32.totalorder %s33, 1
      %p261 = por %p259, %p260
      %p262 = scmp.ne.s32.totalorder %s253, %s254
      %p263 = scmp.eq.s32.totalorder %s33, 0
      %p264 = por %p262, %p263
      %p265 = scmp.ne.s32.totalorder %s253, %s254
      %p266 = scmp.eq.s32.totalorder %s34, 1
      %p267 = por %p265, %p266
      %p269 = scmp.ne.s32.totalorder %s254, %s268
      %p270 = scmp.eq.s32.totalorder %s34, 0
      %p271 = por %p269, %p270
      %s273 = sadd.s32 %s272, 1
      %p276 = scmp.eq.s32.totalorder %s28, 1
      %p277 = scmp.ne.s32.totalorder %s272, %s274
      %p278 = scmp.eq.s32.totalorder %s28, 0
      %p279 = por %p277, %p278
      %p280 = scmp.ne.s32.totalorder %s272, %s274
      %p281 = scmp.eq.s32.totalorder %s33, 1
      %p282 = por %p280, %p281
      %p283 = scmp.ne.s32.totalorder %s274, %s275
      %p284 = scmp.eq.s32.totalorder %s33, 0
      %p285 = por %p283, %p284
      %p286 = scmp.ne.s32.totalorder %s274, %s275
      %p287 = scmp.eq.s32.totalorder %s34, 1
      %p288 = por %p286, %p287
      %p290 = scmp.ne.s32.totalorder %s275, %s289
      %p291 = scmp.eq.s32.totalorder %s34, 0
      %p292 = por %p290, %p291
      %s294 = sadd.s32 %s293, 1
      %p297 = scmp.eq.s32.totalorder %s28, 1
      %p298 = scmp.ne.s32.totalorder %s293, %s295
      %p299 = scmp.eq.s32.totalorder %s28, 0
      %p300 = por %p298, %p299
      %p301 = scmp.ne.s32.totalorder %s293, %s295
      %p302 = scmp.eq.s32.totalorder %s33, 1
      %p303 = por %p301, %p302
      %p304 = scmp.ne.s32.totalorder %s295, %s296
      %p305 = scmp.eq.s32.totalorder %s33, 0
      %p306 = por %p304, %p305
      %p307 = scmp.ne.s32.totalorder %s295, %s296
      %p308 = scmp.eq.s32.totalorder %s34, 1
      %p309 = por %p307, %p308
      %p311 = scmp.ne.s32.totalorder %s296, %s310
      %p312 = scmp.eq.s32.totalorder %s34, 0
      %p313 = por %p311, %p312
      %s314 = ssub.s32 %s28, %s35
      %p315 = scmp.eq.s32.totalorder %s314, 0
      %s317 = sadd.s32 %s316, 1
      %s318 = scalar_select %p315, %s316, %s317
      %p321 = pneg %p315
      %p322 = scmp.eq.s32.totalorder %s28, 1
      %p323 = por %p321, %p322
      %p324 = scmp.ne.s32.totalorder %s316, %s319
      %p325 = scmp.eq.s32.totalorder %s28, 0
      %p326 = por %p324, %p325
      %p327 = scmp.ne.s32.totalorder %s316, %s319
      %p328 = scmp.eq.s32.totalorder %s33, 1
      %p329 = por %p327, %p328
      %p330 = scmp.ne.s32.totalorder %s319, %s320
      %p331 = scmp.eq.s32.totalorder %s33, 0
      %p332 = por %p330, %p331
      %p333 = scmp.ne.s32.totalorder %s319, %s320
      %p334 = scmp.eq.s32.totalorder %s34, 1
      %p335 = por %p333, %p334
      %p337 = scmp.ne.s32.totalorder %s320, %s336
      %p338 = scmp.eq.s32.totalorder %s34, 0
      %p339 = por %p337, %p338
      %p340 = scmp.le.s32.totalorder 1, %s28
      %p341 = scmp.lt.s32.totalorder %s28, 3
      %p342 = pnand %p340, %p341
      %p343 = pneg %p342
      // Predicated region
      $region9: #{tpu_custom_call.1} parent=5 // pred_check
        _
      $region10: #{tpu_custom_call.1} parent=5 // pred_check_branch
        %345 = sbr.rel (%p342) target = $region12
      $region11: #{tpu_custom_call.1} parent=5 // pred_region
        %s346 = ssub.s32 %s28, 1
        // Predicated region
        $region13: #{tpu_custom_call.1} parent=11 // pred_check
          %p347 = pneg %p75
        $region14: #{tpu_custom_call.1} parent=11 // pred_check_branch
          %349 = sbr.rel (%p347) target = $region16
        $region15: #{tpu_custom_call.1} parent=11 // pred_region
          %s351 = ssub.s32 16, 16
          %352 = vsyncadd [#allocation6], %s351
          %s354 = sshll.u32 [#allocation5], 4
          %s355 = int_to_ptr.vmem [resolvable:$true] %s354
          %357 = dma.hbm_to_vmem [thread:$0]  %s1, 16, %s355, [#allocation6]
        $region16: #{tpu_custom_call.1} parent=11 // pred_fallthru
          _
        // Predicated region
        $region17: #{tpu_custom_call.1} parent=11 // pred_check
          %p358 = pneg %p96
        $region18: #{tpu_custom_call.1} parent=11 // pred_check_branch
          %360 = sbr.rel (%p358) target = $region20
        $region19: #{tpu_custom_call.1} parent=11 // pred_region
          %s362 = ssub.s32 16, 16
          %363 = vsyncadd [#allocation6], %s362
          %s365 = sshll.u32 [#allocation7], 4
          %s366 = int_to_ptr.vmem [resolvable:$true] %s365
          %368 = dma.hbm_to_vmem [thread:$0]  %s2, 16, %s366, [#allocation6]
        $region20: #{tpu_custom_call.1} parent=11 // pred_fallthru
          _
        // Predicated region
        $region21: #{tpu_custom_call.1} parent=11 // pred_check
          %p369 = pneg %p117
        $region22: #{tpu_custom_call.1} parent=11 // pred_check_branch
          %371 = sbr.rel (%p369) target = $region24
        $region23: #{tpu_custom_call.1} parent=11 // pred_region
          %s373 = ssub.s32 3072, 3072
          %374 = vsyncadd [#allocation9], %s373
          %s375 = sshll.u32 [#allocation8], 4
          %s376 = int_to_ptr.vmem [resolvable:$true] %s375
          %381 = dma.hbm_to_vmem [thread:$0]  %s3, 3072, %s376, [#allocation9], 192, 192, 12
        $region24: #{tpu_custom_call.1} parent=11 // pred_fallthru
          _
        // Predicated region
        $region25: #{tpu_custom_call.1} parent=11 // pred_check
          %p382 = pneg %p138
        $region26: #{tpu_custom_call.1} parent=11 // pred_check_branch
          %384 = sbr.rel (%p382) target = $region28
        $region27: #{tpu_custom_call.1} parent=11 // pred_region
          _
        $region28: #{tpu_custom_call.1} parent=11 // pred_fallthru
          _
        // Predicated region
        $region29: #{tpu_custom_call.1} parent=11 // pred_check
          %p385 = pneg %p159
        $region30: #{tpu_custom_call.1} parent=11 // pred_check_branch
          %387 = sbr.rel (%p385) target = $region32
        $region31: #{tpu_custom_call.1} parent=11 // pred_region
          %s389 = ssub.s32 1024, 1024
          %390 = vsyncadd [#allocation9], %s389
          %s391 = sshll.u32 [#allocation10], 4
          %s392 = int_to_ptr.vmem [resolvable:$true] %s391
          %397 = dma.hbm_to_vmem [thread:$0]  %s5, 1024, %s392, [#allocation9], 64, 64, 4
        $region32: #{tpu_custom_call.1} parent=11 // pred_fallthru
          _
        // Predicated region
        $region33: #{tpu_custom_call.1} parent=11 // pred_check
          %p398 = pneg %p180
        $region34: #{tpu_custom_call.1} parent=11 // pred_check_branch
          %400 = sbr.rel (%p398) target = $region36
        $region35: #{tpu_custom_call.1} parent=11 // pred_region
          _
        $region36: #{tpu_custom_call.1} parent=11 // pred_fallthru
          _
        // Predicated region
        $region37: #{tpu_custom_call.1} parent=11 // pred_check
          %p401 = pneg %p201
        $region38: #{tpu_custom_call.1} parent=11 // pred_check_branch
          %403 = sbr.rel (%p401) target = $region40
        $region39: #{tpu_custom_call.1} parent=11 // pred_region
          _
        $region40: #{tpu_custom_call.1} parent=11 // pred_fallthru
          _
        // Predicated region
        $region41: #{tpu_custom_call.1} parent=11 // pred_check
          %p404 = pneg %p222
        $region42: #{tpu_custom_call.1} parent=11 // pred_check_branch
          %406 = sbr.rel (%p404) target = $region44
        $region43: #{tpu_custom_call.1} parent=11 // pred_region
          _
        $region44: #{tpu_custom_call.1} parent=11 // pred_fallthru
          _
        // Predicated region
        $region45: #{tpu_custom_call.1} parent=11 // pred_check
          %p407 = pneg %p243
        $region46: #{tpu_custom_call.1} parent=11 // pred_check_branch
          %409 = sbr.rel (%p407) target = $region48
        $region47: #{tpu_custom_call.1} parent=11 // pred_region
          %s411 = ssub.s32 4096, 4096
          %412 = vsyncadd [#allocation12], %s411
          %s413 = sshll.u32 [#allocation11], 4
          %s414 = int_to_ptr.vmem [resolvable:$true] %s413
          %419 = dma.hbm_to_vmem [thread:$0]  %s9, 4096, %s414, [#allocation12], 256, 256, 16
        $region48: #{tpu_custom_call.1} parent=11 // pred_fallthru
          _
        // Predicated region
        $region49: #{tpu_custom_call.1} parent=11 // pred_check
          %p420 = pneg %p264
        $region50: #{tpu_custom_call.1} parent=11 // pred_check_branch
          %422 = sbr.rel (%p420) target = $region52
        $region51: #{tpu_custom_call.1} parent=11 // pred_region
          _
        $region52: #{tpu_custom_call.1} parent=11 // pred_fallthru
          _
        // Predicated region
        $region53: #{tpu_custom_call.1} parent=11 // pred_check
          %p423 = pneg %p285
        $region54: #{tpu_custom_call.1} parent=11 // pred_check_branch
          %425 = sbr.rel (%p423) target = $region56
        $region55: #{tpu_custom_call.1} parent=11 // pred_region
          %s427 = ssub.s32 4096, 4096
          %428 = vsyncadd [#allocation12], %s427
          %s429 = sshll.u32 [#allocation13], 4
          %s430 = int_to_ptr.vmem [resolvable:$true] %s429
          %435 = dma.hbm_to_vmem [thread:$0]  %s11, 4096, %s430, [#allocation12], 64, 64, 4
        $region56: #{tpu_custom_call.1} parent=11 // pred_fallthru
          _
        // Predicated region
        $region57: #{tpu_custom_call.1} parent=11 // pred_check
          %p436 = pneg %p306
        $region58: #{tpu_custom_call.1} parent=11 // pred_check_branch
          %438 = sbr.rel (%p436) target = $region60
        $region59: #{tpu_custom_call.1} parent=11 // pred_region
          _
        $region60: #{tpu_custom_call.1} parent=11 // pred_fallthru
          _
      $region12: #{tpu_custom_call.1} parent=5 // pred_fallthru
        _
      %p439 = scmp.lt.s32.totalorder %s28, 2
      // Predicated region
      $region61: #{tpu_custom_call.1} parent=5 // pred_check
        %p440 = pneg %p439
      $region62: #{tpu_custom_call.1} parent=5 // pred_check_branch
        %442 = sbr.rel (%p440) target = $region64
      $region63: #{tpu_custom_call.1} parent=5 // pred_region
        // Predicated region
        $region65: #{tpu_custom_call.1} parent=63 // pred_check
          %p443 = pneg %p48
        $region66: #{tpu_custom_call.1} parent=63 // pred_check_branch
          %445 = sbr.rel (%p443) target = $region68
        $region67: #{tpu_custom_call.1} parent=63 // pred_region
          %s446 = sand.u32 %s38, 1
          %s447 = scalar_lea.sflag [#allocation3], %s446
          %s448 = sand.u32 %s38, 1
          %s449 = smul.addr %s448, 8
          %s450 = scalar_lea.vmem [#allocation2], %s449
          %s452 = ssub.s32 128, 128
          %453 = vsyncadd %s447, %s452
          %s454 = smul.addr %s28, 128
          %s455 = scalar_lea.hbm %s0, %s454
          %s457 = sshll.u32 %s450, 4
          %s458 = int_to_ptr.vmem [resolvable:$true] %s457
          %460 = dma.hbm_to_vmem [thread:$0]  %s455, 128, %s458, %s447
        $region68: #{tpu_custom_call.1} parent=63 // pred_fallthru
          _
      $region64: #{tpu_custom_call.1} parent=5 // pred_fallthru
        _
      %p461 = scmp.le.s32.totalorder 1, %s28
      %p462 = scmp.lt.s32.totalorder %s28, 3
      %p463 = pnand %p461, %p462
      %p464 = pneg %p463
      // Predicated region
      $region69: #{tpu_custom_call.1} parent=5 // pred_check
        _
      $region70: #{tpu_custom_call.1} parent=5 // pred_check_branch
        %466 = sbr.rel (%p463) target = $region72
      $region71: #{tpu_custom_call.1} parent=5 // pred_region
        %s467 = ssub.s32 %s28, 1
        %s468 = sand.u32 %s41, 1
        %s469 = scalar_lea.sflag [#allocation3], %s468
        %s470 = sand.u32 %s41, 1
        %s471 = smul.addr %s470, 8
        %s472 = scalar_lea.vmem [#allocation2], %s471
        // Predicated region
        $region73: #{tpu_custom_call.1} parent=71 // pred_check
          %p473 = pneg %p54
        $region74: #{tpu_custom_call.1} parent=71 // pred_check_branch
          %475 = sbr.rel (%p473) target = $region76
        $region75: #{tpu_custom_call.1} parent=71 // pred_region
          %476 = dma.done %s469, 128
        $region76: #{tpu_custom_call.1} parent=71 // pred_fallthru
          _
        // Predicated region
        $region77: #{tpu_custom_call.1} parent=71 // pred_check
          %p477 = pneg %p75
        $region78: #{tpu_custom_call.1} parent=71 // pred_check_branch
          %479 = sbr.rel (%p477) target = $region80
        $region79: #{tpu_custom_call.1} parent=71 // pred_region
          %480 = dma.done [#allocation6], 16
        $region80: #{tpu_custom_call.1} parent=71 // pred_fallthru
          _
        // Predicated region
        $region81: #{tpu_custom_call.1} parent=71 // pred_check
          %p481 = pneg %p96
        $region82: #{tpu_custom_call.1} parent=71 // pred_check_branch
          %483 = sbr.rel (%p481) target = $region84
        $region83: #{tpu_custom_call.1} parent=71 // pred_region
          %484 = dma.done [#allocation6], 16
        $region84: #{tpu_custom_call.1} parent=71 // pred_fallthru
          _
        // Predicated region
        $region85: #{tpu_custom_call.1} parent=71 // pred_check
          %p485 = pneg %p117
        $region86: #{tpu_custom_call.1} parent=71 // pred_check_branch
          %487 = sbr.rel (%p485) target = $region88
        $region87: #{tpu_custom_call.1} parent=71 // pred_region
          %488 = dma.done [#allocation9], 3072
        $region88: #{tpu_custom_call.1} parent=71 // pred_fallthru
          _
        // Predicated region
        $region89: #{tpu_custom_call.1} parent=71 // pred_check
          %p489 = pneg %p159
        $region90: #{tpu_custom_call.1} parent=71 // pred_check_branch
          %491 = sbr.rel (%p489) target = $region92
        $region91: #{tpu_custom_call.1} parent=71 // pred_region
          %492 = dma.done [#allocation9], 1024
        $region92: #{tpu_custom_call.1} parent=71 // pred_fallthru
          _
        // Predicated region
        $region93: #{tpu_custom_call.1} parent=71 // pred_check
          %p493 = pneg %p243
        $region94: #{tpu_custom_call.1} parent=71 // pred_check_branch
          %495 = sbr.rel (%p493) target = $region96
        $region95: #{tpu_custom_call.1} parent=71 // pred_region
          %496 = dma.done [#allocation12], 4096
        $region96: #{tpu_custom_call.1} parent=71 // pred_fallthru
          _
        // Predicated region
        $region97: #{tpu_custom_call.1} parent=71 // pred_check
          %p497 = pneg %p285
        $region98: #{tpu_custom_call.1} parent=71 // pred_check_branch
          %499 = sbr.rel (%p497) target = $region100
        $region99: #{tpu_custom_call.1} parent=71 // pred_region
          %500 = dma.done [#allocation12], 4096
        $region100: #{tpu_custom_call.1} parent=71 // pred_fallthru
          _
        %s501 = sand.u32 %s41, 1
        %s502 = scalar_lea.sflag [#allocation3], %s501
        %s503 = sand.u32 %s41, 1
        %s504 = smul.addr %s503, 8
        %s505 = scalar_lea.vmem [#allocation2], %s504
        %p506 = pneg %p54
        %p507 = pneg %p51
        %p508 = pneg %p75
        %p509 = pneg %p72
        %p510 = pneg %p96
        %p511 = pneg %p93
        %p512 = pneg %p117
        %p513 = pneg %p114
        %p514 = pneg %p138
        %p515 = pneg %p135
        %p516 = pneg %p159
        %p517 = pneg %p156
        %p518 = pneg %p180
        %p519 = pneg %p177
        %p520 = pneg %p201
        %p521 = pneg %p198
        %p522 = pneg %p222
        %p523 = pneg %p219
        %p524 = pneg %p243
        %p525 = pneg %p240
        %p526 = pneg %p264
        %p527 = pneg %p261
        %p528 = pneg %p285
        %p529 = pneg %p282
        %p530 = pneg %p306
        %p531 = pneg %p303
        %p532 = pneg %p332
        %p533 = pneg %p329
        %s534 = sand.u32 %s319, 1
        %s535 = scalar_lea.sflag [#allocation4], %s534
        %s536 = sand.u32 %s319, 1
        %s537 = smul.addr %s536, 8
        %s538 = scalar_lea.vmem [#allocation14], %s537
        %v540 = vld [vmem:[%s472] sm:$0xff]
        %v541 = vld [vmem:[#allocation5] sm:$0x1]
        %v542 = vld [vmem:[#allocation7] sm:$0x1]
        %543 = vadd.xlane.f32.xlu0 %v540
        %v544 = vpop.xlane.xlu0 %543
        %v545 = vrcp.pop 128.0
        %v546 = vmul.f32 %v544, %v545
        %v547 = vsub.f32 %v540, %v546
        %v548 = vmul.f32 %v547, %v547
        %549 = vadd.xlane.f32.xlu0 %v548
        %v550 = vpop.xlane.xlu0 %549
        %v551 = vmul.f32 %v550, %v545
        %v552 = vadd.f32 %v551, 1e-05
        %v553 = vrsqrt.pop %v552
        %v554 = vmul.f32 %v547, %v553
        %v556 = vlaneseq
        %v557 = vshrl.u32 %v556, 7
        %v558 = vsub.s32 0, %v557
        %v559 = vrot.slane %v541, %v558
        %v561 = vmul.f32 %v554, %v559
        %v563 = vlaneseq
        %v564 = vshrl.u32 %v563, 7
        %v565 = vsub.s32 0, %v564
        %v566 = vrot.slane %v542, %v565
        %v568 = vadd.f32 %v561, %v566
        %v569 = vpack.c.bf16 %v568, %v568
        %v570 = vld [vmem:[#allocation8] sm:$0xff]
        %v571 = vld [vmem:[#allocation8 + $0x8] sm:$0xf]
        %v572 = vld [vmem:[#allocation8 + $0xc] sm:$0xff]
        %v573 = vld [vmem:[#allocation8 + $0x14] sm:$0xf]
        %v574 = vld [vmem:[#allocation8 + $0x18] sm:$0xff]
        %v575 = vld [vmem:[#allocation8 + $0x20] sm:$0xf]
        %v576 = vld [vmem:[#allocation8 + $0x24] sm:$0xff]
        %v577 = vld [vmem:[#allocation8 + $0x2c] sm:$0xf]
        %v578 = vld [vmem:[#allocation8 + $0x30] sm:$0xff]
        %v579 = vld [vmem:[#allocation8 + $0x38] sm:$0xf]
        %v580 = vld [vmem:[#allocation8 + $0x3c] sm:$0xff]
        %v581 = vld [vmem:[#allocation8 + $0x44] sm:$0xf]
        %v582 = vld [vmem:[#allocation8 + $0x48] sm:$0xff]
        %v583 = vld [vmem:[#allocation8 + $0x50] sm:$0xf]
        %v584 = vld [vmem:[#allocation8 + $0x54] sm:$0xff]
        %v585 = vld [vmem:[#allocation8 + $0x5c] sm:$0xf]
        %v586 = vld [vmem:[#allocation8 + $0x60] sm:$0xff]
        %v587 = vld [vmem:[#allocation8 + $0x68] sm:$0xf]
        %v588 = vld [vmem:[#allocation8 + $0x6c] sm:$0xff]
        %v589 = vld [vmem:[#allocation8 + $0x74] sm:$0xf]
        %v590 = vld [vmem:[#allocation8 + $0x78] sm:$0xff]
        %v591 = vld [vmem:[#allocation8 + $0x80] sm:$0xf]
        %v592 = vld [vmem:[#allocation8 + $0x84] sm:$0xff]
        %v593 = vld [vmem:[#allocation8 + $0x8c] sm:$0xf]
        %v594 = vld [vmem:[#allocation8 + $0x90] sm:$0xff]
        %v595 = vld [vmem:[#allocation8 + $0x98] sm:$0xf]
        %v596 = vld [vmem:[#allocation8 + $0x9c] sm:$0xff]
        %v597 = vld [vmem:[#allocation8 + $0xa4] sm:$0xf]
        %v598 = vld [vmem:[#allocation8 + $0xa8] sm:$0xff]
        %v599 = vld [vmem:[#allocation8 + $0xb0] sm:$0xf]
        %v600 = vld [vmem:[#allocation8 + $0xb4] sm:$0xff]
        %v601 = vld [vmem:[#allocation8 + $0xbc] sm:$0xf]
        %v602 = vld [vmem:[%s4] sm:$0x7]
        %v604 = vlaneseq
        %v605 = vshrl.u32 %v604, 7
        %v606 = vsub.s32 0, %v605
        %v607 = vrot.slane %v602, %v606
        %v608 = vlaneseq
        %v609 = vshrl.u32 %v608, 7
        %v610 = vsub.s32 1, %v609
        %v611 = vrot.slane %v602, %v610
        %v612 = vlaneseq
        %v613 = vshrl.u32 %v612, 7
        %v614 = vsub.s32 2, %v613
        %v615 = vrot.slane %v602, %v614
        %v651 = vunpack.c.l.b16 %v570
        %v652 = vunpack.c.h.b16 %v570
        %v653 = vunpack.c.l.b16 %v571
        %v654 = vunpack.c.l.b16 %v572
        %v655 = vunpack.c.h.b16 %v572
        %v656 = vunpack.c.l.b16 %v573
        %v657 = vunpack.c.l.b16 %v574
        %v658 = vunpack.c.h.b16 %v574
        %v659 = vunpack.c.l.b16 %v575
        %v660 = vunpack.c.l.b16 %v576
        %v661 = vunpack.c.h.b16 %v576
        %v662 = vunpack.c.l.b16 %v577
        %v663 = vunpack.c.l.b16 %v578
        %v664 = vunpack.c.h.b16 %v578
        %v665 = vunpack.c.l.b16 %v579
        %v666 = vunpack.c.l.b16 %v580
        %v667 = vunpack.c.h.b16 %v580
        %v668 = vunpack.c.l.b16 %v581
        %v669 = vunpack.c.l.b16 %v582
        %v670 = vunpack.c.h.b16 %v582
        %v671 = vunpack.c.l.b16 %v583
        %v672 = vunpack.c.l.b16 %v584
        %v673 = vunpack.c.h.b16 %v584
        %v674 = vunpack.c.l.b16 %v585
        %v675 = vunpack.c.l.b16 %v586
        %v676 = vunpack.c.h.b16 %v586
        %v677 = vunpack.c.l.b16 %v587
        %v678 = vunpack.c.l.b16 %v588
        %v679 = vunpack.c.h.b16 %v588
        %v680 = vunpack.c.l.b16 %v589
        %v681 = vunpack.c.l.b16 %v590
        %v682 = vunpack.c.h.b16 %v590
        %v683 = vunpack.c.l.b16 %v591
        %v684 = vunpack.c.l.b16 %v592
        %v685 = vunpack.c.h.b16 %v592
        %v686 = vunpack.c.l.b16 %v593
        %v687 = vunpack.c.l.b16 %v594
        %v688 = vunpack.c.h.b16 %v594
        %v689 = vunpack.c.l.b16 %v595
        %v690 = vunpack.c.l.b16 %v596
        %v691 = vunpack.c.h.b16 %v596
        %v692 = vunpack.c.l.b16 %v597
        %v693 = vunpack.c.l.b16 %v598
        %v694 = vunpack.c.h.b16 %v598
        %v695 = vunpack.c.l.b16 %v599
        %v696 = vunpack.c.l.b16 %v600
        %v697 = vunpack.c.h.b16 %v600
        %v698 = vunpack.c.l.b16 %v601
        %v699 = vpack.c.b16 %v654, %v651
        %v700 = vpack.c.b16 %v655, %v652
        %v701 = vpack.c.b16 %v656, %v653
        %v702 = vpack.c.b16 %v660, %v657
        %v703 = vpack.c.b16 %v661, %v658
        %v704 = vpack.c.b16 %v662, %v659
        %v705 = vpack.c.b16 %v666, %v663
        %v706 = vpack.c.b16 %v667, %v664
        %v707 = vpack.c.b16 %v668, %v665
        %v708 = vpack.c.b16 %v672, %v669
        %v709 = vpack.c.b16 %v673, %v670
        %v710 = vpack.c.b16 %v674, %v671
        %v711 = vpack.c.b16 %v678, %v675
        %v712 = vpack.c.b16 %v679, %v676
        %v713 = vpack.c.b16 %v680, %v677
        %v714 = vpack.c.b16 %v684, %v681
        %v715 = vpack.c.b16 %v685, %v682
        %v716 = vpack.c.b16 %v686, %v683
        %v717 = vpack.c.b16 %v690, %v687
        %v718 = vpack.c.b16 %v691, %v688
        %v719 = vpack.c.b16 %v692, %v689
        %v720 = vpack.c.b16 %v696, %v693
        %v721 = vpack.c.b16 %v697, %v694
        %v722 = vpack.c.b16 %v698, %v695
        %747 = vmatprep.subr.bf16.mxu0 %v700
        %748 = vmatpush1.bf16.msra.mxu0 %v699
        %749 = vmatprep.subr.bf16.mxu0 %v703
        %750 = vmatpush1.bf16.msra.mxu0 %v702
        %751 = vmatprep.subr.bf16.mxu0 %v706
        %752 = vmatpush1.bf16.msra.mxu0 %v705
        %753 = vmatprep.subr.bf16.mxu0 %v709
        %754 = vmatpush1.bf16.msra.mxu0 %v708
        %755 = vmatprep.subr.bf16.mxu0 %v712
        %756 = vmatpush1.bf16.msra.mxu0 %v711
        %757 = vmatprep.subr.bf16.mxu0 %v715
        %758 = vmatpush1.bf16.msra.mxu0 %v714
        %759 = vmatprep.subr.bf16.mxu0 %v718
        %760 = vmatpush1.bf16.msra.mxu0 %v717
        %761 = vmatprep.subr.bf16.mxu0 %v721
        %762 = vmatpush1.bf16.msra.mxu0 %v720
        %763 = vmatprep.subr.bf16.mxu0 0
        %764 = vmatpush1.bf16.msra.mxu0 0
        %765 = vmatprep.subr.bf16.mxu0 0
        %766 = vmatpush1.bf16.msra.mxu0 0
        %767 = vmatprep.subr.bf16.mxu0 0
        %768 = vmatpush1.bf16.msra.mxu0 0
        %769 = vmatprep.subr.bf16.mxu0 0
        %770 = vmatpush1.bf16.msra.mxu0 0
        %771 = vmatprep.subr.bf16.mxu0 0
        %772 = vmatpush1.bf16.msra.mxu0 0
        %773 = vmatprep.subr.bf16.mxu0 0
        %774 = vmatpush1.bf16.msra.mxu0 0
        %775 = vmatprep.subr.bf16.mxu0 0
        %776 = vmatpush1.bf16.msra.mxu0 0
        %777 = vmatprep.subr.bf16.mxu0 0
        %778 = vmatpush1.bf16.msra.mxu0 0
        %779 = vmatprep.mubr.bf16.mxu0 0
        %780 = vmatmul.mubr.bf16.gmra.mrb[0].mxu0 %v569
        %v781 = vpop.f32.mrb[0].mxu0
        %v782 = vadd.f32 %v607, %v781
        %v783 = vpop.f32.mrb[0].mxu0
        %v784 = vadd.f32 %v611, %v783
        %v785 = vpop.f32.mrb[0].mxu0
        %v786 = vpop.f32.mrb[0].mxu0
        %787 = vdwg.mxu0
        %788 = vmatprep.subr.bf16.mxu0 0
        %789 = vmatpush1.bf16.msra.mxu0 %v701
        %790 = vmatprep.subr.bf16.mxu0 0
        %791 = vmatpush1.bf16.msra.mxu0 %v704
        %792 = vmatprep.subr.bf16.mxu0 0
        %793 = vmatpush1.bf16.msra.mxu0 %v707
        %794 = vmatprep.subr.bf16.mxu0 0
        %795 = vmatpush1.bf16.msra.mxu0 %v710
        %796 = vmatprep.subr.bf16.mxu0 0
        %797 = vmatpush1.bf16.msra.mxu0 %v713
        %798 = vmatprep.subr.bf16.mxu0 0
        %799 = vmatpush1.bf16.msra.mxu0 %v716
        %800 = vmatprep.subr.bf16.mxu0 0
        %801 = vmatpush1.bf16.msra.mxu0 %v719
        %802 = vmatprep.subr.bf16.mxu0 0
        %803 = vmatpush1.bf16.msra.mxu0 %v722
        %804 = vmatprep.subr.bf16.mxu0 0
        %805 = vmatpush1.bf16.msra.mxu0 0
        %806 = vmatprep.subr.bf16.mxu0 0
        %807 = vmatpush1.bf16.msra.mxu0 0
        %808 = vmatprep.subr.bf16.mxu0 0
        %809 = vmatpush1.bf16.msra.mxu0 0
        %810 = vmatprep.subr.bf16.mxu0 0
        %811 = vmatpush1.bf16.msra.mxu0 0
        %812 = vmatprep.subr.bf16.mxu0 0
        %813 = vmatpush1.bf16.msra.mxu0 0
        %814 = vmatprep.subr.bf16.mxu0 0
        %815 = vmatpush1.bf16.msra.mxu0 0
        %816 = vmatprep.subr.bf16.mxu0 0
        %817 = vmatpush1.bf16.msra.mxu0 0
        %818 = vmatprep.subr.bf16.mxu0 0
        %819 = vmatpush1.bf16.msra.mxu0 0
        %820 = vmatprep.mubr.bf16.mxu0 0
        %821 = vmatmul.mubr.bf16.gmra.mrb[0].mxu0 %v569
        %v822 = vpop.f32.mrb[0].mxu0
        %v823 = vadd.f32 %v615, %v822
        %v824 = vpop.f32.mrb[0].mxu0
        %v825 = vpop.f32.mrb[0].mxu0
        %v826 = vpop.f32.mrb[0].mxu0
        %827 = vdwg.mxu0
        %829 = vrot.lane.b32.xlu0 %v782, 96
        %v830 = vpop.permute.xlu0 %829
        %832 = vrot.lane.b32.xlu0 %v782, 64
        %v833 = vpop.permute.xlu0 %832
        %835 = vrot.lane.b32.xlu0 %v782, 32
        %v836 = vpop.permute.xlu0 %835
        %v838 = vcombine.low %v782, %v833
        %v839 = vcombine.high %v782, %v833
        %v841 = vunpack.c.l.s4 1983009808
        %v842 = vunpack.c.0.s8 %v841
        %v843 = vlaneseq
        %v844 = vshrl.u32 %v843, 7
        %v845 = vsub.s32 %v842, %v844
        %v846 = vrot.slane %v838, %v845
        %v848 = vunpack.c.l.s4 1983009808
        %v849 = vunpack.c.0.s8 %v848
        %v850 = vlaneseq
        %v851 = vshrl.u32 %v850, 7
        %v852 = vsub.s32 %v849, %v851
        %v853 = vrot.slane %v839, %v852
        %v854 = vcombine.low %v830, %v836
        %v855 = vcombine.high %v830, %v836
        %v857 = vunpack.c.l.s4 1983009808
        %v858 = vunpack.c.0.s8 %v857
        %v859 = vlaneseq
        %v860 = vshrl.u32 %v859, 7
        %v861 = vsub.s32 %v858, %v860
        %v862 = vrot.slane %v854, %v861
        %v864 = vunpack.c.l.s4 1983009808
        %v865 = vunpack.c.0.s8 %v864
        %v866 = vlaneseq
        %v867 = vshrl.u32 %v866, 7
        %v868 = vsub.s32 %v865, %v867
        %v869 = vrot.slane %v855, %v868
        %v870 = vcombine.low %v846, %v862
        %v871 = vcombine.high %v846, %v862
        %v873 = vunpack.c.l.s4 1934713408
        %v874 = vunpack.c.0.s8 %v873
        %v875 = vlaneseq
        %v876 = vshrl.u32 %v875, 7
        %v877 = vsub.s32 %v874, %v876
        %v878 = vrot.slane %v870, %v877
        %v880 = vunpack.c.l.s4 1934713408
        %v881 = vunpack.c.0.s8 %v880
        %v882 = vlaneseq
        %v883 = vshrl.u32 %v882, 7
        %v884 = vsub.s32 %v881, %v883
        %v885 = vrot.slane %v871, %v884
        %v886 = vcombine.low %v853, %v869
        %v887 = vcombine.high %v853, %v869
        %v889 = vunpack.c.l.s4 1934713408
        %v890 = vunpack.c.0.s8 %v889
        %v891 = vlaneseq
        %v892 = vshrl.u32 %v891, 7
        %v893 = vsub.s32 %v890, %v892
        %v894 = vrot.slane %v886, %v893
        %v896 = vunpack.c.l.s4 1934713408
        %v897 = vunpack.c.0.s8 %v896
        %v898 = vlaneseq
        %v899 = vshrl.u32 %v898, 7
        %v900 = vsub.s32 %v897, %v899
        %v901 = vrot.slane %v887, %v900
        %v902 = vcombine.high %v878, 0.0
        %v903 = vcombine.high %v885, 0.0
        %v904 = vcombine.high %v894, 0.0
        %v905 = vcombine.high %v901, 0.0
        %v906 = vcombine.low %v878, %v885
        %v908 = vunpack.c.l.s4 1983009808
        %v909 = vunpack.c.0.s8 %v908
        %v910 = vlaneseq
        %v911 = vshrl.u32 %v910, 7
        %v912 = vsub.s32 %v909, %v911
        %v913 = vrot.slane %v906, %v912
        %v914 = vcombine.low %v902, %v903
        %v916 = vunpack.c.l.s4 1983009808
        %v917 = vunpack.c.0.s8 %v916
        %v918 = vlaneseq
        %v919 = vshrl.u32 %v918, 7
        %v920 = vsub.s32 %v917, %v919
        %v921 = vrot.slane %v914, %v920
        %v922 = vcombine.low %v894, %v901
        %v924 = vunpack.c.l.s4 1983009808
        %v925 = vunpack.c.0.s8 %v924
        %v926 = vlaneseq
        %v927 = vshrl.u32 %v926, 7
        %v928 = vsub.s32 %v925, %v927
        %v929 = vrot.slane %v922, %v928
        %v930 = vcombine.low %v904, %v905
        %v932 = vunpack.c.l.s4 1983009808
        %v933 = vunpack.c.0.s8 %v932
        %v934 = vlaneseq
        %v935 = vshrl.u32 %v934, 7
        %v936 = vsub.s32 %v933, %v935
        %v937 = vrot.slane %v930, %v936
        %v938 = vcombine.low %v913, %v921
        %v939 = vcombine.high %v913, %v921
        %v941 = vunpack.c.l.s4 1934713408
        %v942 = vunpack.c.0.s8 %v941
        %v943 = vlaneseq
        %v944 = vshrl.u32 %v943, 7
        %v945 = vsub.s32 %v942, %v944
        %v946 = vrot.slane %v938, %v945
        %v948 = vunpack.c.l.s4 1934713408
        %v949 = vunpack.c.0.s8 %v948
        %v950 = vlaneseq
        %v951 = vshrl.u32 %v950, 7
        %v952 = vsub.s32 %v949, %v951
        %v953 = vrot.slane %v939, %v952
        %v954 = vcombine.low %v929, %v937
        %v955 = vcombine.high %v929, %v937
        %v957 = vunpack.c.l.s4 1934713408
        %v958 = vunpack.c.0.s8 %v957
        %v959 = vlaneseq
        %v960 = vshrl.u32 %v959, 7
        %v961 = vsub.s32 %v958, %v960
        %v962 = vrot.slane %v954, %v961
        %v964 = vunpack.c.l.s4 1934713408
        %v965 = vunpack.c.0.s8 %v964
        %v966 = vlaneseq
        %v967 = vshrl.u32 %v966, 7
        %v968 = vsub.s32 %v965, %v967
        %v969 = vrot.slane %v955, %v968
        %v970 = vcombine.low %v946, %v962
        %v971 = vcombine.high %v946, %v962
        %v972 = vcombine.low %v953, %v969
        %v973 = vcombine.high %v953, %v969
        %975 = vrot.lane.b32.xlu0 %v784, 96
        %v976 = vpop.permute.xlu0 %975
        %978 = vrot.lane.b32.xlu0 %v784, 64
        %v979 = vpop.permute.xlu0 %978
        %981 = vrot.lane.b32.xlu0 %v784, 32
        %v982 = vpop.permute.xlu0 %981
        %v984 = vcombine.low %v784, %v979
        %v985 = vcombine.high %v784, %v979
        %v987 = vunpack.c.l.s4 1983009808
        %v988 = vunpack.c.0.s8 %v987
        %v989 = vlaneseq
        %v990 = vshrl.u32 %v989, 7
        %v991 = vsub.s32 %v988, %v990
        %v992 = vrot.slane %v984, %v991
        %v994 = vunpack.c.l.s4 1983009808
        %v995 = vunpack.c.0.s8 %v994
        %v996 = vlaneseq
        %v997 = vshrl.u32 %v996, 7
        %v998 = vsub.s32 %v995, %v997
        %v999 = vrot.slane %v985, %v998
        %v1000 = vcombine.low %v976, %v982
        %v1001 = vcombine.high %v976, %v982
        %v1003 = vunpack.c.l.s4 1983009808
        %v1004 = vunpack.c.0.s8 %v1003
        %v1005 = vlaneseq
        %v1006 = vshrl.u32 %v1005, 7
        %v1007 = vsub.s32 %v1004, %v1006
        %v1008 = vrot.slane %v1000, %v1007
        %v1010 = vunpack.c.l.s4 1983009808
        %v1011 = vunpack.c.0.s8 %v1010
        %v1012 = vlaneseq
        %v1013 = vshrl.u32 %v1012, 7
        %v1014 = vsub.s32 %v1011, %v1013
        %v1015 = vrot.slane %v1001, %v1014
        %v1016 = vcombine.low %v992, %v1008
        %v1017 = vcombine.high %v992, %v1008
        %v1019 = vunpack.c.l.s4 1934713408
        %v1020 = vunpack.c.0.s8 %v1019
        %v1021 = vlaneseq
        %v1022 = vshrl.u32 %v1021, 7
        %v1023 = vsub.s32 %v1020, %v1022
        %v1024 = vrot.slane %v1016, %v1023
        %v1026 = vunpack.c.l.s4 1934713408
        %v1027 = vunpack.c.0.s8 %v1026
        %v1028 = vlaneseq
        %v1029 = vshrl.u32 %v1028, 7
        %v1030 = vsub.s32 %v1027, %v1029
        %v1031 = vrot.slane %v1017, %v1030
        %v1032 = vcombine.low %v999, %v1015
        %v1033 = vcombine.high %v999, %v1015
        %v1035 = vunpack.c.l.s4 1934713408
        %v1036 = vunpack.c.0.s8 %v1035
        %v1037 = vlaneseq
        %v1038 = vshrl.u32 %v1037, 7
        %v1039 = vsub.s32 %v1036, %v1038
        %v1040 = vrot.slane %v1032, %v1039
        %v1042 = vunpack.c.l.s4 1934713408
        %v1043 = vunpack.c.0.s8 %v1042
        %v1044 = vlaneseq
        %v1045 = vshrl.u32 %v1044, 7
        %v1046 = vsub.s32 %v1043, %v1045
        %v1047 = vrot.slane %v1033, %v1046
        %v1048 = vcombine.high %v1024, 0.0
        %v1049 = vcombine.high %v1031, 0.0
        %v1050 = vcombine.high %v1040, 0.0
        %v1051 = vcombine.high %v1047, 0.0
        %v1052 = vcombine.low %v1024, %v1031
        %v1054 = vunpack.c.l.s4 1983009808
        %v1055 = vunpack.c.0.s8 %v1054
        %v1056 = vlaneseq
        %v1057 = vshrl.u32 %v1056, 7
        %v1058 = vsub.s32 %v1055, %v1057
        %v1059 = vrot.slane %v1052, %v1058
        %v1060 = vcombine.low %v1048, %v1049
        %v1062 = vunpack.c.l.s4 1983009808
        %v1063 = vunpack.c.0.s8 %v1062
        %v1064 = vlaneseq
        %v1065 = vshrl.u32 %v1064, 7
        %v1066 = vsub.s32 %v1063, %v1065
        %v1067 = vrot.slane %v1060, %v1066
        %v1068 = vcombine.low %v1040, %v1047
        %v1070 = vunpack.c.l.s4 1983009808
        %v1071 = vunpack.c.0.s8 %v1070
        %v1072 = vlaneseq
        %v1073 = vshrl.u32 %v1072, 7
        %v1074 = vsub.s32 %v1071, %v1073
        %v1075 = vrot.slane %v1068, %v1074
        %v1076 = vcombine.low %v1050, %v1051
        %v1078 = vunpack.c.l.s4 1983009808
        %v1079 = vunpack.c.0.s8 %v1078
        %v1080 = vlaneseq
        %v1081 = vshrl.u32 %v1080, 7
        %v1082 = vsub.s32 %v1079, %v1081
        %v1083 = vrot.slane %v1076, %v1082
        %v1084 = vcombine.low %v1059, %v1067
        %v1085 = vcombine.high %v1059, %v1067
        %v1087 = vunpack.c.l.s4 1934713408
        %v1088 = vunpack.c.0.s8 %v1087
        %v1089 = vlaneseq
        %v1090 = vshrl.u32 %v1089, 7
        %v1091 = vsub.s32 %v1088, %v1090
        %v1092 = vrot.slane %v1084, %v1091
        %v1094 = vunpack.c.l.s4 1934713408
        %v1095 = vunpack.c.0.s8 %v1094
        %v1096 = vlaneseq
        %v1097 = vshrl.u32 %v1096, 7
        %v1098 = vsub.s32 %v1095, %v1097
        %v1099 = vrot.slane %v1085, %v1098
        %v1100 = vcombine.low %v1075, %v1083
        %v1101 = vcombine.high %v1075, %v1083
        %v1103 = vunpack.c.l.s4 1934713408
        %v1104 = vunpack.c.0.s8 %v1103
        %v1105 = vlaneseq
        %v1106 = vshrl.u32 %v1105, 7
        %v1107 = vsub.s32 %v1104, %v1106
        %v1108 = vrot.slane %v1100, %v1107
        %v1110 = vunpack.c.l.s4 1934713408
        %v1111 = vunpack.c.0.s8 %v1110
        %v1112 = vlaneseq
        %v1113 = vshrl.u32 %v1112, 7
        %v1114 = vsub.s32 %v1111, %v1113
        %v1115 = vrot.slane %v1101, %v1114
        %v1116 = vcombine.low %v1092, %v1108
        %v1117 = vcombine.high %v1092, %v1108
        %v1118 = vcombine.low %v1099, %v1115
        %v1119 = vcombine.high %v1099, %v1115
        %1121 = vrot.lane.b32.xlu0 %v823, 96
        %v1122 = vpop.permute.xlu0 %1121
        %1124 = vrot.lane.b32.xlu0 %v823, 64
        %v1125 = vpop.permute.xlu0 %1124
        %1127 = vrot.lane.b32.xlu0 %v823, 32
        %v1128 = vpop.permute.xlu0 %1127
        %v1130 = vcombine.low %v823, %v1125
        %v1131 = vcombine.high %v823, %v1125
        %v1133 = vunpack.c.l.s4 1983009808
        %v1134 = vunpack.c.0.s8 %v1133
        %v1135 = vlaneseq
        %v1136 = vshrl.u32 %v1135, 7
        %v1137 = vsub.s32 %v1134, %v1136
        %v1138 = vrot.slane %v1130, %v1137
        %v1140 = vunpack.c.l.s4 1983009808
        %v1141 = vunpack.c.0.s8 %v1140
        %v1142 = vlaneseq
        %v1143 = vshrl.u32 %v1142, 7
        %v1144 = vsub.s32 %v1141, %v1143
        %v1145 = vrot.slane %v1131, %v1144
        %v1146 = vcombine.low %v1122, %v1128
        %v1147 = vcombine.high %v1122, %v1128
        %v1149 = vunpack.c.l.s4 1983009808
        %v1150 = vunpack.c.0.s8 %v1149
        %v1151 = vlaneseq
        %v1152 = vshrl.u32 %v1151, 7
        %v1153 = vsub.s32 %v1150, %v1152
        %v1154 = vrot.slane %v1146, %v1153
        %v1156 = vunpack.c.l.s4 1983009808
        %v1157 = vunpack.c.0.s8 %v1156
        %v1158 = vlaneseq
        %v1159 = vshrl.u32 %v1158, 7
        %v1160 = vsub.s32 %v1157, %v1159
        %v1161 = vrot.slane %v1147, %v1160
        %v1162 = vcombine.low %v1138, %v1154
        %v1163 = vcombine.high %v1138, %v1154
        %v1165 = vunpack.c.l.s4 1934713408
        %v1166 = vunpack.c.0.s8 %v1165
        %v1167 = vlaneseq
        %v1168 = vshrl.u32 %v1167, 7
        %v1169 = vsub.s32 %v1166, %v1168
        %v1170 = vrot.slane %v1162, %v1169
        %v1172 = vunpack.c.l.s4 1934713408
        %v1173 = vunpack.c.0.s8 %v1172
        %v1174 = vlaneseq
        %v1175 = vshrl.u32 %v1174, 7
        %v1176 = vsub.s32 %v1173, %v1175
        %v1177 = vrot.slane %v1163, %v1176
        %v1178 = vcombine.low %v1145, %v1161
        %v1179 = vcombine.high %v1145, %v1161
        %v1181 = vunpack.c.l.s4 1934713408
        %v1182 = vunpack.c.0.s8 %v1181
        %v1183 = vlaneseq
        %v1184 = vshrl.u32 %v1183, 7
        %v1185 = vsub.s32 %v1182, %v1184
        %v1186 = vrot.slane %v1178, %v1185
        %v1188 = vunpack.c.l.s4 1934713408
        %v1189 = vunpack.c.0.s8 %v1188
        %v1190 = vlaneseq
        %v1191 = vshrl.u32 %v1190, 7
        %v1192 = vsub.s32 %v1189, %v1191
        %v1193 = vrot.slane %v1179, %v1192
        %v1194 = vcombine.high %v1170, 0.0
        %v1195 = vcombine.high %v1177, 0.0
        %v1196 = vcombine.high %v1186, 0.0
        %v1197 = vcombine.high %v1193, 0.0
        %v1198 = vcombine.low %v1170, %v1177
        %v1200 = vunpack.c.l.s4 1983009808
        %v1201 = vunpack.c.0.s8 %v1200
        %v1202 = vlaneseq
        %v1203 = vshrl.u32 %v1202, 7
        %v1204 = vsub.s32 %v1201, %v1203
        %v1205 = vrot.slane %v1198, %v1204
        %v1206 = vcombine.low %v1194, %v1195
        %v1208 = vunpack.c.l.s4 1983009808
        %v1209 = vunpack.c.0.s8 %v1208
        %v1210 = vlaneseq
        %v1211 = vshrl.u32 %v1210, 7
        %v1212 = vsub.s32 %v1209, %v1211
        %v1213 = vrot.slane %v1206, %v1212
        %v1214 = vcombine.low %v1186, %v1193
        %v1216 = vunpack.c.l.s4 1983009808
        %v1217 = vunpack.c.0.s8 %v1216
        %v1218 = vlaneseq
        %v1219 = vshrl.u32 %v1218, 7
        %v1220 = vsub.s32 %v1217, %v1219
        %v1221 = vrot.slane %v1214, %v1220
        %v1222 = vcombine.low %v1196, %v1197
        %v1224 = vunpack.c.l.s4 1983009808
        %v1225 = vunpack.c.0.s8 %v1224
        %v1226 = vlaneseq
        %v1227 = vshrl.u32 %v1226, 7
        %v1228 = vsub.s32 %v1225, %v1227
        %v1229 = vrot.slane %v1222, %v1228
        %v1230 = vcombine.low %v1205, %v1213
        %v1231 = vcombine.high %v1205, %v1213
        %v1233 = vunpack.c.l.s4 1934713408
        %v1234 = vunpack.c.0.s8 %v1233
        %v1235 = vlaneseq
        %v1236 = vshrl.u32 %v1235, 7
        %v1237 = vsub.s32 %v1234, %v1236
        %v1238 = vrot.slane %v1230, %v1237
        %v1240 = vunpack.c.l.s4 1934713408
        %v1241 = vunpack.c.0.s8 %v1240
        %v1242 = vlaneseq
        %v1243 = vshrl.u32 %v1242, 7
        %v1244 = vsub.s32 %v1241, %v1243
        %v1245 = vrot.slane %v1231, %v1244
        %v1246 = vcombine.low %v1221, %v1229
        %v1247 = vcombine.high %v1221, %v1229
        %v1249 = vunpack.c.l.s4 1934713408
        %v1250 = vunpack.c.0.s8 %v1249
        %v1251 = vlaneseq
        %v1252 = vshrl.u32 %v1251, 7
        %v1253 = vsub.s32 %v1250, %v1252
        %v1254 = vrot.slane %v1246, %v1253
        %v1256 = vunpack.c.l.s4 1934713408
        %v1257 = vunpack.c.0.s8 %v1256
        %v1258 = vlaneseq
        %v1259 = vshrl.u32 %v1258, 7
        %v1260 = vsub.s32 %v1257, %v1259
        %v1261 = vrot.slane %v1247, %v1260
        %v1262 = vcombine.low %v1238, %v1254
        %v1263 = vcombine.high %v1238, %v1254
        %v1264 = vcombine.low %v1245, %v1261
        %v1265 = vcombine.high %v1245, %v1261
        %v1266 = vlaneseq
        %v1267 = vshrl.u32 %v1266, 7
        %v1268 = vlaneseq
        %v1269 = vand.u32 %v1268, 127
        %vm1270 = vcmp.ge.s32.totalorder %v1267, %v1269
        %v1271 = vsel %vm1270, 0.0, -1e+30
        %v1272 = vpack.c.bf16 %v970, %v970
        %v1273 = vpack.c.bf16 %v971, %v971
        %v1274 = vpack.c.bf16 %v972, %v972
        %v1275 = vpack.c.bf16 %v973, %v973
        %v1276 = vpack.c.bf16 %v1116, %v1116
        %v1277 = vpack.c.bf16 %v1117, %v1117
        %v1278 = vpack.c.bf16 %v1118, %v1118
        %v1279 = vpack.c.bf16 %v1119, %v1119
        %vm1280 = vcmask 261120
        %v1282 = vsel %vm1280, %v1272, 0
        %v1285 = vsel %vm1280, %v1276, 0
        %1287 = vmatprep.subr.bf16.mxu0 0
        %1288 = vmatpush1.bf16.xpose.msra.mxu0 %v1285
        %1289 = vmatprep.subr.bf16.mxu0 0
        %1290 = vmatpush1.bf16.xpose.msra.mxu0 0
        %1291 = vmatprep.subr.bf16.mxu0 0
        %1292 = vmatpush1.bf16.xpose.msra.mxu0 0
        %1293 = vmatprep.subr.bf16.mxu0 0
        %1294 = vmatpush1.bf16.xpose.msra.mxu0 0
        %1295 = vmatprep.subr.bf16.mxu0 0
        %1296 = vmatpush1.bf16.xpose.msra.mxu0 0
        %1297 = vmatprep.subr.bf16.mxu0 0
        %1298 = vmatpush1.bf16.xpose.msra.mxu0 0
        %1299 = vmatprep.subr.bf16.mxu0 0
        %1300 = vmatpush1.bf16.xpose.msra.mxu0 0
        %1301 = vmatprep.subr.bf16.mxu0 0
        %1302 = vmatpush1.bf16.xpose.msra.mxu0 0
        %1303 = vmatprep.subr.bf16.mxu0 0
        %1304 = vmatpush1.bf16.xpose.msra.mxu0 0
        %1305 = vmatprep.subr.bf16.mxu0 0
        %1306 = vmatpush1.bf16.xpose.msra.mxu0 0
        %1307 = vmatprep.subr.bf16.mxu0 0
        %1308 = vmatpush1.bf16.xpose.msra.mxu0 0
        %1309 = vmatprep.subr.bf16.mxu0 0
        %1310 = vmatpush1.bf16.xpose.msra.mxu0 0
        %1311 = vmatprep.subr.bf16.mxu0 0
        %1312 = vmatpush1.bf16.xpose.msra.mxu0 0
        %1313 = vmatprep.subr.bf16.mxu0 0
        %1314 = vmatpush1.bf16.xpose.msra.mxu0 0
        %1315 = vmatprep.subr.bf16.mxu0 0
        %1316 = vmatpush1.bf16.xpose.msra.mxu0 0
        %1317 = vmatprep.subr.bf16.mxu0 0
        %1318 = vmatpush1.bf16.xpose.msra.mxu0 0
        %1319 = vmatprep.mubr.bf16.mxu0 0
        %1320 = vmatmul.mubr.bf16.gmra.mrb[0].mxu0 %v1282
        %v1321 = vpop.f32.mrb[0].mxu0
        %v1322 = vadd.f32 %v1271, %v1321
        %v1323 = vpop.f32.mrb[0].mxu0
        %v1324 = vpop.f32.mrb[0].mxu0
        %v1325 = vpop.f32.mrb[0].mxu0
        %1326 = vdwg.mxu0
        %v1328 = vsel %vm1280, %v1273, 0
        %v1331 = vsel %vm1280, %v1277, 0
        %1333 = vmatprep.subr.bf16.mxu0 0
        %1334 = vmatpush1.bf16.xpose.msra.mxu0 %v1331
        %1335 = vmatprep.subr.bf16.mxu0 0
        %1336 = vmatpush1.bf16.xpose.msra.mxu0 0
        %1337 = vmatprep.subr.bf16.mxu0 0
        %1338 = vmatpush1.bf16.xpose.msra.mxu0 0
        %1339 = vmatprep.subr.bf16.mxu0 0
        %1340 = vmatpush1.bf16.xpose.msra.mxu0 0
        %1341 = vmatprep.subr.bf16.mxu0 0
        %1342 = vmatpush1.bf16.xpose.msra.mxu0 0
        %1343 = vmatprep.subr.bf16.mxu0 0
        %1344 = vmatpush1.bf16.xpose.msra.mxu0 0
        %1345 = vmatprep.subr.bf16.mxu0 0
        %1346 = vmatpush1.bf16.xpose.msra.mxu0 0
        %1347 = vmatprep.subr.bf16.mxu0 0
        %1348 = vmatpush1.bf16.xpose.msra.mxu0 0
        %1349 = vmatprep.subr.bf16.mxu0 0
        %1350 = vmatpush1.bf16.xpose.msra.mxu0 0
        %1351 = vmatprep.subr.bf16.mxu0 0
        %1352 = vmatpush1.bf16.xpose.msra.mxu0 0
        %1353 = vmatprep.subr.bf16.mxu0 0
        %1354 = vmatpush1.bf16.xpose.msra.mxu0 0
        %1355 = vmatprep.subr.bf16.mxu0 0
        %1356 = vmatpush1.bf16.xpose.msra.mxu0 0
        %1357 = vmatprep.subr.bf16.mxu0 0
        %1358 = vmatpush1.bf16.xpose.msra.mxu0 0
        %1359 = vmatprep.subr.bf16.mxu0 0
        %1360 = vmatpush1.bf16.xpose.msra.mxu0 0
        %1361 = vmatprep.subr.bf16.mxu0 0
        %1362 = vmatpush1.bf16.xpose.msra.mxu0 0
        %1363 = vmatprep.subr.bf16.mxu0 0
        %1364 = vmatpush1.bf16.xpose.msra.mxu0 0
        %1365 = vmatprep.mubr.bf16.mxu0 0
        %1366 = vmatmul.mubr.bf16.gmra.mrb[0].mxu0 %v1328
        %v1367 = vpop.f32.mrb[0].mxu0
        %v1368 = vadd.f32 %v1271, %v1367
        %v1369 = vpop.f32.mrb[0].mxu0
        %v1370 = vpop.f32.mrb[0].mxu0
        %v1371 = vpop.f32.mrb[0].mxu0
        %1372 = vdwg.mxu0
        %v1374 = vsel %vm1280, %v1274, 0
        %v1377 = vsel %vm1280, %v1278, 0
        %1379 = vmatprep.subr.bf16.mxu0 0
        %1380 = vmatpush1.bf16.xpose.msra.mxu0 %v1377
        %1381 = vmatprep.subr.bf16.mxu0 0
        %1382 = vmatpush1.bf16.xpose.msra.mxu0 0
        %1383 = vmatprep.subr.bf16.mxu0 0
        %1384 = vmatpush1.bf16.xpose.msra.mxu0 0
        %1385 = vmatprep.subr.bf16.mxu0 0
        %1386 = vmatpush1.bf16.xpose.msra.mxu0 0
        %1387 = vmatprep.subr.bf16.mxu0 0
        %1388 = vmatpush1.bf16.xpose.msra.mxu0 0
        %1389 = vmatprep.subr.bf16.mxu0 0
        %1390 = vmatpush1.bf16.xpose.msra.mxu0 0
        %1391 = vmatprep.subr.bf16.mxu0 0
        %1392 = vmatpush1.bf16.xpose.msra.mxu0 0
        %1393 = vmatprep.subr.bf16.mxu0 0
        %1394 = vmatpush1.bf16.xpose.msra.mxu0 0
        %1395 = vmatprep.subr.bf16.mxu0 0
        %1396 = vmatpush1.bf16.xpose.msra.mxu0 0
        %1397 = vmatprep.subr.bf16.mxu0 0
        %1398 = vmatpush1.bf16.xpose.msra.mxu0 0
        %1399 = vmatprep.subr.bf16.mxu0 0
        %1400 = vmatpush1.bf16.xpose.msra.mxu0 0
        %1401 = vmatprep.subr.bf16.mxu0 0
        %1402 = vmatpush1.bf16.xpose.msra.mxu0 0
        %1403 = vmatprep.subr.bf16.mxu0 0
        %1404 = vmatpush1.bf16.xpose.msra.mxu0 0
        %1405 = vmatprep.subr.bf16.mxu0 0
        %1406 = vmatpush1.bf16.xpose.msra.mxu0 0
        %1407 = vmatprep.subr.bf16.mxu0 0
        %1408 = vmatpush1.bf16.xpose.msra.mxu0 0
        %1409 = vmatprep.subr.bf16.mxu0 0
        %1410 = vmatpush1.bf16.xpose.msra.mxu0 0
        %1411 = vmatprep.mubr.bf16.mxu0 0
        %1412 = vmatmul.mubr.bf16.gmra.mrb[0].mxu0 %v1374
        %v1413 = vpop.f32.mrb[0].mxu0
        %v1414 = vadd.f32 %v1271, %v1413
        %v1415 = vpop.f32.mrb[0].mxu0
        %v1416 = vpop.f32.mrb[0].mxu0
        %v1417 = vpop.f32.mrb[0].mxu0
        %1418 = vdwg.mxu0
        %v1420 = vsel %vm1280, %v1275, 0
        %v1423 = vsel %vm1280, %v1279, 0
        %1425 = vmatprep.subr.bf16.mxu0 0
        %1426 = vmatpush1.bf16.xpose.msra.mxu0 %v1423
        %1427 = vmatprep.subr.bf16.mxu0 0
        %1428 = vmatpush1.bf16.xpose.msra.mxu0 0
        %1429 = vmatprep.subr.bf16.mxu0 0
        %1430 = vmatpush1.bf16.xpose.msra.mxu0 0
        %1431 = vmatprep.subr.bf16.mxu0 0
        %1432 = vmatpush1.bf16.xpose.msra.mxu0 0
        %1433 = vmatprep.subr.bf16.mxu0 0
        %1434 = vmatpush1.bf16.xpose.msra.mxu0 0
        %1435 = vmatprep.subr.bf16.mxu0 0
        %1436 = vmatpush1.bf16.xpose.msra.mxu0 0
        %1437 = vmatprep.subr.bf16.mxu0 0
        %1438 = vmatpush1.bf16.xpose.msra.mxu0 0
        %1439 = vmatprep.subr.bf16.mxu0 0
        %1440 = vmatpush1.bf16.xpose.msra.mxu0 0
        %1441 = vmatprep.subr.bf16.mxu0 0
        %1442 = vmatpush1.bf16.xpose.msra.mxu0 0
        %1443 = vmatprep.subr.bf16.mxu0 0
        %1444 = vmatpush1.bf16.xpose.msra.mxu0 0
        %1445 = vmatprep.subr.bf16.mxu0 0
        %1446 = vmatpush1.bf16.xpose.msra.mxu0 0
        %1447 = vmatprep.subr.bf16.mxu0 0
        %1448 = vmatpush1.bf16.xpose.msra.mxu0 0
        %1449 = vmatprep.subr.bf16.mxu0 0
        %1450 = vmatpush1.bf16.xpose.msra.mxu0 0
        %1451 = vmatprep.subr.bf16.mxu0 0
        %1452 = vmatpush1.bf16.xpose.msra.mxu0 0
        %1453 = vmatprep.subr.bf16.mxu0 0
        %1454 = vmatpush1.bf16.xpose.msra.mxu0 0
        %1455 = vmatprep.subr.bf16.mxu0 0
        %1456 = vmatpush1.bf16.xpose.msra.mxu0 0
        %1457 = vmatprep.mubr.bf16.mxu0 0
        %1458 = vmatmul.mubr.bf16.gmra.mrb[0].mxu0 %v1420
        %v1459 = vpop.f32.mrb[0].mxu0
        %v1460 = vadd.f32 %v1271, %v1459
        %v1461 = vpop.f32.mrb[0].mxu0
        %v1462 = vpop.f32.mrb[0].mxu0
        %v1463 = vpop.f32.mrb[0].mxu0
        %1464 = vdwg.mxu0
        %vm1465 = vcmask 64512
        %v1466 = vsel %vm1465, %v1322, -inf
        %1467 = vmax.xlane.f32.xlu0 %v1466
        %v1468 = vpop.xlane.xlu0 %1467
        %v1469 = vsel %vm1465, %v1368, -inf
        %1470 = vmax.xlane.f32.xlu0 %v1469
        %v1471 = vpop.xlane.xlu0 %1470
        %v1472 = vsel %vm1465, %v1414, -inf
        %1473 = vmax.xlane.f32.xlu0 %v1472
        %v1474 = vpop.xlane.xlu0 %1473
        %v1475 = vsel %vm1465, %v1460, -inf
        %1476 = vmax.xlane.f32.xlu0 %v1475
        %v1477 = vpop.xlane.xlu0 %1476
        %v1478 = vsub.f32 %v1322, %v1468
        %v1479 = vsub.f32 %v1368, %v1471
        %v1480 = vsub.f32 %v1414, %v1474
        %v1481 = vsub.f32 %v1460, %v1477
        %v1482 = vmul.f32 %v1478, 1.442695
        %v1483 = vpow.pop %v1482
        %v1484 = vmul.f32 %v1479, 1.442695
        %v1485 = vpow.pop %v1484
        %v1486 = vmul.f32 %v1480, 1.442695
        %v1487 = vpow.pop %v1486
        %v1488 = vmul.f32 %v1481, 1.442695
        %v1489 = vpow.pop %v1488
        %v1490 = vsel %vm1465, %v1483, 0.0
        %1491 = vadd.xlane.f32.xlu0 %v1490
        %v1492 = vpop.xlane.xlu0 %1491
        %v1493 = vsel %vm1465, %v1485, 0.0
        %1494 = vadd.xlane.f32.xlu0 %v1493
        %v1495 = vpop.xlane.xlu0 %1494
        %v1496 = vsel %vm1465, %v1487, 0.0
        %1497 = vadd.xlane.f32.xlu0 %v1496
        %v1498 = vpop.xlane.xlu0 %1497
        %v1499 = vsel %vm1465, %v1489, 0.0
        %1500 = vadd.xlane.f32.xlu0 %v1499
        %v1501 = vpop.xlane.xlu0 %1500
        %v1502 = vrcp.pop %v1492
        %v1503 = vrcp.pop %v1495
        %v1504 = vrcp.pop %v1498
        %v1505 = vrcp.pop %v1501
        %v1506 = vmul.f32 %v1483, %v1502
        %v1507 = vmul.f32 %v1485, %v1503
        %v1508 = vmul.f32 %v1487, %v1504
        %v1509 = vmul.f32 %v1489, %v1505
        %v1510 = vpack.c.bf16 %v1506, %v1506
        %v1511 = vpack.c.bf16 %v1507, %v1507
        %v1512 = vpack.c.bf16 %v1508, %v1508
        %v1513 = vpack.c.bf16 %v1509, %v1509
        %v1514 = vpack.c.bf16 %v1262, %v1262
        %v1515 = vpack.c.bf16 %v1263, %v1263
        %v1516 = vpack.c.bf16 %v1264, %v1264
        %v1517 = vpack.c.bf16 %v1265, %v1265
        %v1519 = vsel %vm1465, %v1510, 0
        %vm1521 = vcmask 1043456
        %v1523 = vsel %vm1521, %v1514, 0
        %1525 = vmatprep.subr.bf16.mxu0 0
        %1526 = vmatpush1.bf16.msra.mxu0 %v1523
        %1527 = vmatprep.subr.bf16.mxu0 0
        %1528 = vmatpush1.bf16.msra.mxu0 0
        %1529 = vmatprep.subr.bf16.mxu0 0
        %1530 = vmatpush1.bf16.msra.mxu0 0
        %1531 = vmatprep.subr.bf16.mxu0 0
        %1532 = vmatpush1.bf16.msra.mxu0 0
        %1533 = vmatprep.subr.bf16.mxu0 0
        %1534 = vmatpush1.bf16.msra.mxu0 0
        %1535 = vmatprep.subr.bf16.mxu0 0
        %1536 = vmatpush1.bf16.msra.mxu0 0
        %1537 = vmatprep.subr.bf16.mxu0 0
        %1538 = vmatpush1.bf16.msra.mxu0 0
        %1539 = vmatprep.subr.bf16.mxu0 0
        %1540 = vmatpush1.bf16.msra.mxu0 0
        %1541 = vmatprep.subr.bf16.mxu0 0
        %1542 = vmatpush1.bf16.msra.mxu0 0
        %1543 = vmatprep.subr.bf16.mxu0 0
        %1544 = vmatpush1.bf16.msra.mxu0 0
        %1545 = vmatprep.subr.bf16.mxu0 0
        %1546 = vmatpush1.bf16.msra.mxu0 0
        %1547 = vmatprep.subr.bf16.mxu0 0
        %1548 = vmatpush1.bf16.msra.mxu0 0
        %1549 = vmatprep.subr.bf16.mxu0 0
        %1550 = vmatpush1.bf16.msra.mxu0 0
        %1551 = vmatprep.subr.bf16.mxu0 0
        %1552 = vmatpush1.bf16.msra.mxu0 0
        %1553 = vmatprep.subr.bf16.mxu0 0
        %1554 = vmatpush1.bf16.msra.mxu0 0
        %1555 = vmatprep.subr.bf16.mxu0 0
        %1556 = vmatpush1.bf16.msra.mxu0 0
        %1557 = vmatprep.mubr.bf16.mxu0 0
        %1558 = vmatmul.mubr.bf16.gmra.mrb[0].mxu0 %v1519
        %v1559 = vpop.f32.mrb[0].mxu0
        %v1560 = vadd.f32 0.0, %v1559
        %v1561 = vpop.f32.mrb[0].mxu0
        %v1562 = vpop.f32.mrb[0].mxu0
        %v1563 = vpop.f32.mrb[0].mxu0
        %1564 = vdwg.mxu0
        %v1566 = vsel %vm1465, %v1511, 0
        %v1569 = vsel %vm1521, %v1515, 0
        %1571 = vmatprep.subr.bf16.mxu0 0
        %1572 = vmatpush1.bf16.msra.mxu0 %v1569
        %1573 = vmatprep.subr.bf16.mxu0 0
        %1574 = vmatpush1.bf16.msra.mxu0 0
        %1575 = vmatprep.subr.bf16.mxu0 0
        %1576 = vmatpush1.bf16.msra.mxu0 0
        %1577 = vmatprep.subr.bf16.mxu0 0
        %1578 = vmatpush1.bf16.msra.mxu0 0
        %1579 = vmatprep.subr.bf16.mxu0 0
        %1580 = vmatpush1.bf16.msra.mxu0 0
        %1581 = vmatprep.subr.bf16.mxu0 0
        %1582 = vmatpush1.bf16.msra.mxu0 0
        %1583 = vmatprep.subr.bf16.mxu0 0
        %1584 = vmatpush1.bf16.msra.mxu0 0
        %1585 = vmatprep.subr.bf16.mxu0 0
        %1586 = vmatpush1.bf16.msra.mxu0 0
        %1587 = vmatprep.subr.bf16.mxu0 0
        %1588 = vmatpush1.bf16.msra.mxu0 0
        %1589 = vmatprep.subr.bf16.mxu0 0
        %1590 = vmatpush1.bf16.msra.mxu0 0
        %1591 = vmatprep.subr.bf16.mxu0 0
        %1592 = vmatpush1.bf16.msra.mxu0 0
        %1593 = vmatprep.subr.bf16.mxu0 0
        %1594 = vmatpush1.bf16.msra.mxu0 0
        %1595 = vmatprep.subr.bf16.mxu0 0
        %1596 = vmatpush1.bf16.msra.mxu0 0
        %1597 = vmatprep.subr.bf16.mxu0 0
        %1598 = vmatpush1.bf16.msra.mxu0 0
        %1599 = vmatprep.subr.bf16.mxu0 0
        %1600 = vmatpush1.bf16.msra.mxu0 0
        %1601 = vmatprep.subr.bf16.mxu0 0
        %1602 = vmatpush1.bf16.msra.mxu0 0
        %1603 = vmatprep.mubr.bf16.mxu0 0
        %1604 = vmatmul.mubr.bf16.gmra.mrb[0].mxu0 %v1566
        %v1605 = vpop.f32.mrb[0].mxu0
        %v1606 = vadd.f32 0.0, %v1605
        %v1607 = vpop.f32.mrb[0].mxu0
        %v1608 = vpop.f32.mrb[0].mxu0
        %v1609 = vpop.f32.mrb[0].mxu0
        %1610 = vdwg.mxu0
        %v1612 = vsel %vm1465, %v1512, 0
        %v1615 = vsel %vm1521, %v1516, 0
        %1617 = vmatprep.subr.bf16.mxu0 0
        %1618 = vmatpush1.bf16.msra.mxu0 %v1615
        %1619 = vmatprep.subr.bf16.mxu0 0
        %1620 = vmatpush1.bf16.msra.mxu0 0
        %1621 = vmatprep.subr.bf16.mxu0 0
        %1622 = vmatpush1.bf16.msra.mxu0 0
        %1623 = vmatprep.subr.bf16.mxu0 0
        %1624 = vmatpush1.bf16.msra.mxu0 0
        %1625 = vmatprep.subr.bf16.mxu0 0
        %1626 = vmatpush1.bf16.msra.mxu0 0
        %1627 = vmatprep.subr.bf16.mxu0 0
        %1628 = vmatpush1.bf16.msra.mxu0 0
        %1629 = vmatprep.subr.bf16.mxu0 0
        %1630 = vmatpush1.bf16.msra.mxu0 0
        %1631 = vmatprep.subr.bf16.mxu0 0
        %1632 = vmatpush1.bf16.msra.mxu0 0
        %1633 = vmatprep.subr.bf16.mxu0 0
        %1634 = vmatpush1.bf16.msra.mxu0 0
        %1635 = vmatprep.subr.bf16.mxu0 0
        %1636 = vmatpush1.bf16.msra.mxu0 0
        %1637 = vmatprep.subr.bf16.mxu0 0
        %1638 = vmatpush1.bf16.msra.mxu0 0
        %1639 = vmatprep.subr.bf16.mxu0 0
        %1640 = vmatpush1.bf16.msra.mxu0 0
        %1641 = vmatprep.subr.bf16.mxu0 0
        %1642 = vmatpush1.bf16.msra.mxu0 0
        %1643 = vmatprep.subr.bf16.mxu0 0
        %1644 = vmatpush1.bf16.msra.mxu0 0
        %1645 = vmatprep.subr.bf16.mxu0 0
        %1646 = vmatpush1.bf16.msra.mxu0 0
        %1647 = vmatprep.subr.bf16.mxu0 0
        %1648 = vmatpush1.bf16.msra.mxu0 0
        %1649 = vmatprep.mubr.bf16.mxu0 0
        %1650 = vmatmul.mubr.bf16.gmra.mrb[0].mxu0 %v1612
        %v1651 = vpop.f32.mrb[0].mxu0
        %v1652 = vadd.f32 0.0, %v1651
        %v1653 = vpop.f32.mrb[0].mxu0
        %v1654 = vpop.f32.mrb[0].mxu0
        %v1655 = vpop.f32.mrb[0].mxu0
        %1656 = vdwg.mxu0
        %v1658 = vsel %vm1465, %v1513, 0
        %v1661 = vsel %vm1521, %v1517, 0
        %1663 = vmatprep.subr.bf16.mxu0 0
        %1664 = vmatpush1.bf16.msra.mxu0 %v1661
        %1665 = vmatprep.subr.bf16.mxu0 0
        %1666 = vmatpush1.bf16.msra.mxu0 0
        %1667 = vmatprep.subr.bf16.mxu0 0
        %1668 = vmatpush1.bf16.msra.mxu0 0
        %1669 = vmatprep.subr.bf16.mxu0 0
        %1670 = vmatpush1.bf16.msra.mxu0 0
        %1671 = vmatprep.subr.bf16.mxu0 0
        %1672 = vmatpush1.bf16.msra.mxu0 0
        %1673 = vmatprep.subr.bf16.mxu0 0
        %1674 = vmatpush1.bf16.msra.mxu0 0
        %1675 = vmatprep.subr.bf16.mxu0 0
        %1676 = vmatpush1.bf16.msra.mxu0 0
        %1677 = vmatprep.subr.bf16.mxu0 0
        %1678 = vmatpush1.bf16.msra.mxu0 0
        %1679 = vmatprep.subr.bf16.mxu0 0
        %1680 = vmatpush1.bf16.msra.mxu0 0
        %1681 = vmatprep.subr.bf16.mxu0 0
        %1682 = vmatpush1.bf16.msra.mxu0 0
        %1683 = vmatprep.subr.bf16.mxu0 0
        %1684 = vmatpush1.bf16.msra.mxu0 0
        %1685 = vmatprep.subr.bf16.mxu0 0
        %1686 = vmatpush1.bf16.msra.mxu0 0
        %1687 = vmatprep.subr.bf16.mxu0 0
        %1688 = vmatpush1.bf16.msra.mxu0 0
        %1689 = vmatprep.subr.bf16.mxu0 0
        %1690 = vmatpush1.bf16.msra.mxu0 0
        %1691 = vmatprep.subr.bf16.mxu0 0
        %1692 = vmatpush1.bf16.msra.mxu0 0
        %1693 = vmatprep.subr.bf16.mxu0 0
        %1694 = vmatpush1.bf16.msra.mxu0 0
        %1695 = vmatprep.mubr.bf16.mxu0 0
        %1696 = vmatmul.mubr.bf16.gmra.mrb[0].mxu0 %v1658
        %v1697 = vpop.f32.mrb[0].mxu0
        %v1698 = vadd.f32 0.0, %v1697
        %v1699 = vpop.f32.mrb[0].mxu0
        %v1700 = vpop.f32.mrb[0].mxu0
        %v1701 = vpop.f32.mrb[0].mxu0
        %1702 = vdwg.mxu0
        %v1703 = vcombine.low %v1560, %v1652
        %v1704 = vcombine.high %v1560, %v1652
        %v1706 = vunpack.c.l.s4 1983009808
        %v1707 = vunpack.c.0.s8 %v1706
        %v1708 = vlaneseq
        %v1709 = vshrl.u32 %v1708, 7
        %v1710 = vsub.s32 %v1707, %v1709
        %v1711 = vrot.slane %v1703, %v1710
        %v1713 = vunpack.c.l.s4 1983009808
        %v1714 = vunpack.c.0.s8 %v1713
        %v1715 = vlaneseq
        %v1716 = vshrl.u32 %v1715, 7
        %v1717 = vsub.s32 %v1714, %v1716
        %v1718 = vrot.slane %v1704, %v1717
        %v1719 = vcombine.low %v1606, %v1698
        %v1720 = vcombine.high %v1606, %v1698
        %v1722 = vunpack.c.l.s4 1983009808
        %v1723 = vunpack.c.0.s8 %v1722
        %v1724 = vlaneseq
        %v1725 = vshrl.u32 %v1724, 7
        %v1726 = vsub.s32 %v1723, %v1725
        %v1727 = vrot.slane %v1719, %v1726
        %v1729 = vunpack.c.l.s4 1983009808
        %v1730 = vunpack.c.0.s8 %v1729
        %v1731 = vlaneseq
        %v1732 = vshrl.u32 %v1731, 7
        %v1733 = vsub.s32 %v1730, %v1732
        %v1734 = vrot.slane %v1720, %v1733
        %v1735 = vcombine.low %v1711, %v1727
        %v1736 = vcombine.high %v1711, %v1727
        %v1738 = vunpack.c.l.s4 1934713408
        %v1739 = vunpack.c.0.s8 %v1738
        %v1740 = vlaneseq
        %v1741 = vshrl.u32 %v1740, 7
        %v1742 = vsub.s32 %v1739, %v1741
        %v1743 = vrot.slane %v1735, %v1742
        %v1745 = vunpack.c.l.s4 1934713408
        %v1746 = vunpack.c.0.s8 %v1745
        %v1747 = vlaneseq
        %v1748 = vshrl.u32 %v1747, 7
        %v1749 = vsub.s32 %v1746, %v1748
        %v1750 = vrot.slane %v1736, %v1749
        %v1751 = vcombine.low %v1718, %v1734
        %v1752 = vcombine.high %v1718, %v1734
        %v1754 = vunpack.c.l.s4 1934713408
        %v1755 = vunpack.c.0.s8 %v1754
        %v1756 = vlaneseq
        %v1757 = vshrl.u32 %v1756, 7
        %v1758 = vsub.s32 %v1755, %v1757
        %v1759 = vrot.slane %v1751, %v1758
        %v1761 = vunpack.c.l.s4 1934713408
        %v1762 = vunpack.c.0.s8 %v1761
        %v1763 = vlaneseq
        %v1764 = vshrl.u32 %v1763, 7
        %v1765 = vsub.s32 %v1762, %v1764
        %v1766 = vrot.slane %v1752, %v1765
        %v1767 = vcombine.high %v1743, 0.0
        %v1768 = vcombine.high %v1750, 0.0
        %v1769 = vcombine.high %v1759, 0.0
        %v1770 = vcombine.high %v1766, 0.0
        %v1771 = vcombine.low %v1743, %v1750
        %v1773 = vunpack.c.l.s4 1983009808
        %v1774 = vunpack.c.0.s8 %v1773
        %v1775 = vlaneseq
        %v1776 = vshrl.u32 %v1775, 7
        %v1777 = vsub.s32 %v1774, %v1776
        %v1778 = vrot.slane %v1771, %v1777
        %v1779 = vcombine.low %v1767, %v1768
        %v1781 = vunpack.c.l.s4 1983009808
        %v1782 = vunpack.c.0.s8 %v1781
        %v1783 = vlaneseq
        %v1784 = vshrl.u32 %v1783, 7
        %v1785 = vsub.s32 %v1782, %v1784
        %v1786 = vrot.slane %v1779, %v1785
        %v1787 = vcombine.low %v1759, %v1766
        %v1789 = vunpack.c.l.s4 1983009808
        %v1790 = vunpack.c.0.s8 %v1789
        %v1791 = vlaneseq
        %v1792 = vshrl.u32 %v1791, 7
        %v1793 = vsub.s32 %v1790, %v1792
        %v1794 = vrot.slane %v1787, %v1793
        %v1795 = vcombine.low %v1769, %v1770
        %v1797 = vunpack.c.l.s4 1983009808
        %v1798 = vunpack.c.0.s8 %v1797
        %v1799 = vlaneseq
        %v1800 = vshrl.u32 %v1799, 7
        %v1801 = vsub.s32 %v1798, %v1800
        %v1802 = vrot.slane %v1795, %v1801
        %v1803 = vcombine.low %v1778, %v1786
        %v1804 = vcombine.high %v1778, %v1786
        %v1806 = vunpack.c.l.s4 1934713408
        %v1807 = vunpack.c.0.s8 %v1806
        %v1808 = vlaneseq
        %v1809 = vshrl.u32 %v1808, 7
        %v1810 = vsub.s32 %v1807, %v1809
        %v1811 = vrot.slane %v1803, %v1810
        %v1813 = vunpack.c.l.s4 1934713408
        %v1814 = vunpack.c.0.s8 %v1813
        %v1815 = vlaneseq
        %v1816 = vshrl.u32 %v1815, 7
        %v1817 = vsub.s32 %v1814, %v1816
        %v1818 = vrot.slane %v1804, %v1817
        %v1819 = vcombine.low %v1794, %v1802
        %v1820 = vcombine.high %v1794, %v1802
        %v1822 = vunpack.c.l.s4 1934713408
        %v1823 = vunpack.c.0.s8 %v1822
        %v1824 = vlaneseq
        %v1825 = vshrl.u32 %v1824, 7
        %v1826 = vsub.s32 %v1823, %v1825
        %v1827 = vrot.slane %v1819, %v1826
        %v1829 = vunpack.c.l.s4 1934713408
        %v1830 = vunpack.c.0.s8 %v1829
        %v1831 = vlaneseq
        %v1832 = vshrl.u32 %v1831, 7
        %v1833 = vsub.s32 %v1830, %v1832
        %v1834 = vrot.slane %v1820, %v1833
        %v1835 = vcombine.low %v1811, %v1827
        %v1836 = vcombine.high %v1811, %v1827
        %v1837 = vcombine.low %v1818, %v1834
        %v1838 = vcombine.high %v1818, %v1834
        %1840 = vrot.lane.b32.xlu0 %v1836, 32
        %v1841 = vpop.permute.xlu0 %1840
        %1844 = vrot.lane.b32.xlu0 %v1837, 64
        %v1845 = vpop.permute.xlu0 %1844
        %1848 = vrot.lane.b32.xlu0 %v1838, 96
        %v1849 = vpop.permute.xlu0 %1848
        %v1851 = vsel %vm1280, %v1835, %v1841
        %vm1852 = vcmask 523264
        %v1853 = vsel %vm1852, %v1851, %v1845
        %vm1854 = vcmask 785408
        %v1855 = vsel %vm1854, %v1853, %v1849
        %v1856 = vpack.c.bf16 %v1855, %v1855
        %v1857 = vld [vmem:[#allocation10] sm:$0xf]
        %v1858 = vld [vmem:[#allocation10 + $0x4] sm:$0xf]
        %v1859 = vld [vmem:[#allocation10 + $0x8] sm:$0xf]
        %v1860 = vld [vmem:[#allocation10 + $0xc] sm:$0xf]
        %v1861 = vld [vmem:[#allocation10 + $0x10] sm:$0xf]
        %v1862 = vld [vmem:[#allocation10 + $0x14] sm:$0xf]
        %v1863 = vld [vmem:[#allocation10 + $0x18] sm:$0xf]
        %v1864 = vld [vmem:[#allocation10 + $0x1c] sm:$0xf]
        %v1865 = vld [vmem:[#allocation10 + $0x20] sm:$0xf]
        %v1866 = vld [vmem:[#allocation10 + $0x24] sm:$0xf]
        %v1867 = vld [vmem:[#allocation10 + $0x28] sm:$0xf]
        %v1868 = vld [vmem:[#allocation10 + $0x2c] sm:$0xf]
        %v1869 = vld [vmem:[#allocation10 + $0x30] sm:$0xf]
        %v1870 = vld [vmem:[#allocation10 + $0x34] sm:$0xf]
        %v1871 = vld [vmem:[#allocation10 + $0x38] sm:$0xf]
        %v1872 = vld [vmem:[#allocation10 + $0x3c] sm:$0xf]
        %v1873 = vld [vmem:[%s6] sm:$0x1]
        %v1875 = vlaneseq
        %v1876 = vshrl.u32 %v1875, 7
        %v1877 = vsub.s32 0, %v1876
        %v1878 = vrot.slane %v1873, %v1877
        %v1896 = vunpack.c.l.b16 %v1857
        %v1897 = vunpack.c.l.b16 %v1858
        %v1898 = vunpack.c.l.b16 %v1859
        %v1899 = vunpack.c.l.b16 %v1860
        %v1900 = vunpack.c.l.b16 %v1861
        %v1901 = vunpack.c.l.b16 %v1862
        %v1902 = vunpack.c.l.b16 %v1863
        %v1903 = vunpack.c.l.b16 %v1864
        %v1904 = vunpack.c.l.b16 %v1865
        %v1905 = vunpack.c.l.b16 %v1866
        %v1906 = vunpack.c.l.b16 %v1867
        %v1907 = vunpack.c.l.b16 %v1868
        %v1908 = vunpack.c.l.b16 %v1869
        %v1909 = vunpack.c.l.b16 %v1870
        %v1910 = vunpack.c.l.b16 %v1871
        %v1911 = vunpack.c.l.b16 %v1872
        %v1912 = vpack.c.b16 %v1897, %v1896
        %v1913 = vpack.c.b16 %v1899, %v1898
        %v1914 = vpack.c.b16 %v1901, %v1900
        %v1915 = vpack.c.b16 %v1903, %v1902
        %v1916 = vpack.c.b16 %v1905, %v1904
        %v1917 = vpack.c.b16 %v1907, %v1906
        %v1918 = vpack.c.b16 %v1909, %v1908
        %v1919 = vpack.c.b16 %v1911, %v1910
        %1928 = vmatprep.subr.bf16.mxu0 0
        %1929 = vmatpush1.bf16.msra.mxu0 %v1912
        %1930 = vmatprep.subr.bf16.mxu0 0
        %1931 = vmatpush1.bf16.msra.mxu0 %v1913
        %1932 = vmatprep.subr.bf16.mxu0 0
        %1933 = vmatpush1.bf16.msra.mxu0 %v1914
        %1934 = vmatprep.subr.bf16.mxu0 0
        %1935 = vmatpush1.bf16.msra.mxu0 %v1915
        %1936 = vmatprep.subr.bf16.mxu0 0
        %1937 = vmatpush1.bf16.msra.mxu0 %v1916
        %1938 = vmatprep.subr.bf16.mxu0 0
        %1939 = vmatpush1.bf16.msra.mxu0 %v1917
        %1940 = vmatprep.subr.bf16.mxu0 0
        %1941 = vmatpush1.bf16.msra.mxu0 %v1918
        %1942 = vmatprep.subr.bf16.mxu0 0
        %1943 = vmatpush1.bf16.msra.mxu0 %v1919
        %1944 = vmatprep.subr.bf16.mxu0 0
        %1945 = vmatpush1.bf16.msra.mxu0 0
        %1946 = vmatprep.subr.bf16.mxu0 0
        %1947 = vmatpush1.bf16.msra.mxu0 0
        %1948 = vmatprep.subr.bf16.mxu0 0
        %1949 = vmatpush1.bf16.msra.mxu0 0
        %1950 = vmatprep.subr.bf16.mxu0 0
        %1951 = vmatpush1.bf16.msra.mxu0 0
        %1952 = vmatprep.subr.bf16.mxu0 0
        %1953 = vmatpush1.bf16.msra.mxu0 0
        %1954 = vmatprep.subr.bf16.mxu0 0
        %1955 = vmatpush1.bf16.msra.mxu0 0
        %1956 = vmatprep.subr.bf16.mxu0 0
        %1957 = vmatpush1.bf16.msra.mxu0 0
        %1958 = vmatprep.subr.bf16.mxu0 0
        %1959 = vmatpush1.bf16.msra.mxu0 0
        %1960 = vmatprep.mubr.bf16.mxu0 0
        %1961 = vmatmul.mubr.bf16.gmra.mrb[0].mxu0 %v1856
        %v1962 = vpop.f32.mrb[0].mxu0
        %v1963 = vadd.f32 %v1878, %v1962
        %v1964 = vpop.f32.mrb[0].mxu0
        %v1965 = vpop.f32.mrb[0].mxu0
        %v1966 = vpop.f32.mrb[0].mxu0
        %1967 = vdwg.mxu0
        %v1968 = vadd.f32 %v540, %v1963
        %v1969 = vld [vmem:[%s7] sm:$0x1]
        %v1970 = vld [vmem:[%s8] sm:$0x1]
        %1971 = vadd.xlane.f32.xlu0 %v1968
        %v1972 = vpop.xlane.xlu0 %1971
        %v1973 = vmul.f32 %v1972, %v545
        %v1974 = vsub.f32 %v1968, %v1973
        %v1975 = vmul.f32 %v1974, %v1974
        %1976 = vadd.xlane.f32.xlu0 %v1975
        %v1977 = vpop.xlane.xlu0 %1976
        %v1978 = vmul.f32 %v1977, %v545
        %v1979 = vadd.f32 %v1978, 1e-05
        %v1980 = vrsqrt.pop %v1979
        %v1981 = vmul.f32 %v1974, %v1980
        %v1983 = vlaneseq
        %v1984 = vshrl.u32 %v1983, 7
        %v1985 = vsub.s32 0, %v1984
        %v1986 = vrot.slane %v1969, %v1985
        %v1988 = vmul.f32 %v1981, %v1986
        %v1990 = vlaneseq
        %v1991 = vshrl.u32 %v1990, 7
        %v1992 = vsub.s32 0, %v1991
        %v1993 = vrot.slane %v1970, %v1992
        %v1995 = vadd.f32 %v1988, %v1993
        %v1996 = vpack.c.bf16 %v1995, %v1995
        %v1997 = vld [vmem:[#allocation11] sm:$0xff]
        %v1998 = vld [vmem:[#allocation11 + $0x8] sm:$0xff]
        %v1999 = vld [vmem:[#allocation11 + $0x10] sm:$0xff]
        %v2000 = vld [vmem:[#allocation11 + $0x18] sm:$0xff]
        %v2001 = vld [vmem:[#allocation11 + $0x20] sm:$0xff]
        %v2002 = vld [vmem:[#allocation11 + $0x28] sm:$0xff]
        %v2003 = vld [vmem:[#allocation11 + $0x30] sm:$0xff]
        %v2004 = vld [vmem:[#allocation11 + $0x38] sm:$0xff]
        %v2005 = vld [vmem:[#allocation11 + $0x40] sm:$0xff]
        %v2006 = vld [vmem:[#allocation11 + $0x48] sm:$0xff]
        %v2007 = vld [vmem:[#allocation11 + $0x50] sm:$0xff]
        %v2008 = vld [vmem:[#allocation11 + $0x58] sm:$0xff]
        %v2009 = vld [vmem:[#allocation11 + $0x60] sm:$0xff]
        %v2010 = vld [vmem:[#allocation11 + $0x68] sm:$0xff]
        %v2011 = vld [vmem:[#allocation11 + $0x70] sm:$0xff]
        %v2012 = vld [vmem:[#allocation11 + $0x78] sm:$0xff]
        %v2013 = vld [vmem:[#allocation11 + $0x80] sm:$0xff]
        %v2014 = vld [vmem:[#allocation11 + $0x88] sm:$0xff]
        %v2015 = vld [vmem:[#allocation11 + $0x90] sm:$0xff]
        %v2016 = vld [vmem:[#allocation11 + $0x98] sm:$0xff]
        %v2017 = vld [vmem:[#allocation11 + $0xa0] sm:$0xff]
        %v2018 = vld [vmem:[#allocation11 + $0xa8] sm:$0xff]
        %v2019 = vld [vmem:[#allocation11 + $0xb0] sm:$0xff]
        %v2020 = vld [vmem:[#allocation11 + $0xb8] sm:$0xff]
        %v2021 = vld [vmem:[#allocation11 + $0xc0] sm:$0xff]
        %v2022 = vld [vmem:[#allocation11 + $0xc8] sm:$0xff]
        %v2023 = vld [vmem:[#allocation11 + $0xd0] sm:$0xff]
        %v2024 = vld [vmem:[#allocation11 + $0xd8] sm:$0xff]
        %v2025 = vld [vmem:[#allocation11 + $0xe0] sm:$0xff]
        %v2026 = vld [vmem:[#allocation11 + $0xe8] sm:$0xff]
        %v2027 = vld [vmem:[#allocation11 + $0xf0] sm:$0xff]
        %v2028 = vld [vmem:[#allocation11 + $0xf8] sm:$0xff]
        %v2029 = vld [vmem:[%s10] sm:$0xf]
        %v2031 = vlaneseq
        %v2032 = vshrl.u32 %v2031, 7
        %v2033 = vsub.s32 0, %v2032
        %v2034 = vrot.slane %v2029, %v2033
        %v2035 = vlaneseq
        %v2036 = vshrl.u32 %v2035, 7
        %v2037 = vsub.s32 1, %v2036
        %v2038 = vrot.slane %v2029, %v2037
        %v2039 = vlaneseq
        %v2040 = vshrl.u32 %v2039, 7
        %v2041 = vsub.s32 2, %v2040
        %v2042 = vrot.slane %v2029, %v2041
        %v2043 = vlaneseq
        %v2044 = vshrl.u32 %v2043, 7
        %v2045 = vsub.s32 3, %v2044
        %v2046 = vrot.slane %v2029, %v2045
        %v2083 = vunpack.c.l.b16 %v1997
        %v2084 = vunpack.c.h.b16 %v1997
        %v2085 = vunpack.c.l.b16 %v1998
        %v2086 = vunpack.c.h.b16 %v1998
        %v2087 = vunpack.c.l.b16 %v1999
        %v2088 = vunpack.c.h.b16 %v1999
        %v2089 = vunpack.c.l.b16 %v2000
        %v2090 = vunpack.c.h.b16 %v2000
        %v2091 = vunpack.c.l.b16 %v2001
        %v2092 = vunpack.c.h.b16 %v2001
        %v2093 = vunpack.c.l.b16 %v2002
        %v2094 = vunpack.c.h.b16 %v2002
        %v2095 = vunpack.c.l.b16 %v2003
        %v2096 = vunpack.c.h.b16 %v2003
        %v2097 = vunpack.c.l.b16 %v2004
        %v2098 = vunpack.c.h.b16 %v2004
        %v2099 = vunpack.c.l.b16 %v2005
        %v2100 = vunpack.c.h.b16 %v2005
        %v2101 = vunpack.c.l.b16 %v2006
        %v2102 = vunpack.c.h.b16 %v2006
        %v2103 = vunpack.c.l.b16 %v2007
        %v2104 = vunpack.c.h.b16 %v2007
        %v2105 = vunpack.c.l.b16 %v2008
        %v2106 = vunpack.c.h.b16 %v2008
        %v2107 = vunpack.c.l.b16 %v2009
        %v2108 = vunpack.c.h.b16 %v2009
        %v2109 = vunpack.c.l.b16 %v2010
        %v2110 = vunpack.c.h.b16 %v2010
        %v2111 = vunpack.c.l.b16 %v2011
        %v2112 = vunpack.c.h.b16 %v2011
        %v2113 = vunpack.c.l.b16 %v2012
        %v2114 = vunpack.c.h.b16 %v2012
        %v2115 = vunpack.c.l.b16 %v2013
        %v2116 = vunpack.c.h.b16 %v2013
        %v2117 = vunpack.c.l.b16 %v2014
        %v2118 = vunpack.c.h.b16 %v2014
        %v2119 = vunpack.c.l.b16 %v2015
        %v2120 = vunpack.c.h.b16 %v2015
        %v2121 = vunpack.c.l.b16 %v2016
        %v2122 = vunpack.c.h.b16 %v2016
        %v2123 = vunpack.c.l.b16 %v2017
        %v2124 = vunpack.c.h.b16 %v2017
        %v2125 = vunpack.c.l.b16 %v2018
        %v2126 = vunpack.c.h.b16 %v2018
        %v2127 = vunpack.c.l.b16 %v2019
        %v2128 = vunpack.c.h.b16 %v2019
        %v2129 = vunpack.c.l.b16 %v2020
        %v2130 = vunpack.c.h.b16 %v2020
        %v2131 = vunpack.c.l.b16 %v2021
        %v2132 = vunpack.c.h.b16 %v2021
        %v2133 = vunpack.c.l.b16 %v2022
        %v2134 = vunpack.c.h.b16 %v2022
        %v2135 = vunpack.c.l.b16 %v2023
        %v2136 = vunpack.c.h.b16 %v2023
        %v2137 = vunpack.c.l.b16 %v2024
        %v2138 = vunpack.c.h.b16 %v2024
        %v2139 = vunpack.c.l.b16 %v2025
        %v2140 = vunpack.c.h.b16 %v2025
        %v2141 = vunpack.c.l.b16 %v2026
        %v2142 = vunpack.c.h.b16 %v2026
        %v2143 = vunpack.c.l.b16 %v2027
        %v2144 = vunpack.c.h.b16 %v2027
        %v2145 = vunpack.c.l.b16 %v2028
        %v2146 = vunpack.c.h.b16 %v2028
        %v2147 = vpack.c.b16 %v2087, %v2083
        %v2148 = vpack.c.b16 %v2088, %v2084
        %v2149 = vpack.c.b16 %v2089, %v2085
        %v2150 = vpack.c.b16 %v2090, %v2086
        %v2151 = vpack.c.b16 %v2095, %v2091
        %v2152 = vpack.c.b16 %v2096, %v2092
        %v2153 = vpack.c.b16 %v2097, %v2093
        %v2154 = vpack.c.b16 %v2098, %v2094
        %v2155 = vpack.c.b16 %v2103, %v2099
        %v2156 = vpack.c.b16 %v2104, %v2100
        %v2157 = vpack.c.b16 %v2105, %v2101
        %v2158 = vpack.c.b16 %v2106, %v2102
        %v2159 = vpack.c.b16 %v2111, %v2107
        %v2160 = vpack.c.b16 %v2112, %v2108
        %v2161 = vpack.c.b16 %v2113, %v2109
        %v2162 = vpack.c.b16 %v2114, %v2110
        %v2163 = vpack.c.b16 %v2119, %v2115
        %v2164 = vpack.c.b16 %v2120, %v2116
        %v2165 = vpack.c.b16 %v2121, %v2117
        %v2166 = vpack.c.b16 %v2122, %v2118
        %v2167 = vpack.c.b16 %v2127, %v2123
        %v2168 = vpack.c.b16 %v2128, %v2124
        %v2169 = vpack.c.b16 %v2129, %v2125
        %v2170 = vpack.c.b16 %v2130, %v2126
        %v2171 = vpack.c.b16 %v2135, %v2131
        %v2172 = vpack.c.b16 %v2136, %v2132
        %v2173 = vpack.c.b16 %v2137, %v2133
        %v2174 = vpack.c.b16 %v2138, %v2134
        %v2175 = vpack.c.b16 %v2143, %v2139
        %v2176 = vpack.c.b16 %v2144, %v2140
        %v2177 = vpack.c.b16 %v2145, %v2141
        %v2178 = vpack.c.b16 %v2146, %v2142
        %2211 = vmatprep.subr.bf16.mxu0 %v2148
        %2212 = vmatpush1.bf16.msra.mxu0 %v2147
        %2213 = vmatprep.subr.bf16.mxu0 %v2152
        %2214 = vmatpush1.bf16.msra.mxu0 %v2151
        %2215 = vmatprep.subr.bf16.mxu0 %v2156
        %2216 = vmatpush1.bf16.msra.mxu0 %v2155
        %2217 = vmatprep.subr.bf16.mxu0 %v2160
        %2218 = vmatpush1.bf16.msra.mxu0 %v2159
        %2219 = vmatprep.subr.bf16.mxu0 %v2164
        %2220 = vmatpush1.bf16.msra.mxu0 %v2163
        %2221 = vmatprep.subr.bf16.mxu0 %v2168
        %2222 = vmatpush1.bf16.msra.mxu0 %v2167
        %2223 = vmatprep.subr.bf16.mxu0 %v2172
        %2224 = vmatpush1.bf16.msra.mxu0 %v2171
        %2225 = vmatprep.subr.bf16.mxu0 %v2176
        %2226 = vmatpush1.bf16.msra.mxu0 %v2175
        %2227 = vmatprep.subr.bf16.mxu0 0
        %2228 = vmatpush1.bf16.msra.mxu0 0
        %2229 = vmatprep.subr.bf16.mxu0 0
        %2230 = vmatpush1.bf16.msra.mxu0 0
        %2231 = vmatprep.subr.bf16.mxu0 0
        %2232 = vmatpush1.bf16.msra.mxu0 0
        %2233 = vmatprep.subr.bf16.mxu0 0
        %2234 = vmatpush1.bf16.msra.mxu0 0
        %2235 = vmatprep.subr.bf16.mxu0 0
        %2236 = vmatpush1.bf16.msra.mxu0 0
        %2237 = vmatprep.subr.bf16.mxu0 0
        %2238 = vmatpush1.bf16.msra.mxu0 0
        %2239 = vmatprep.subr.bf16.mxu0 0
        %2240 = vmatpush1.bf16.msra.mxu0 0
        %2241 = vmatprep.subr.bf16.mxu0 0
        %2242 = vmatpush1.bf16.msra.mxu0 0
        %2243 = vmatprep.mubr.bf16.mxu0 0
        %2244 = vmatmul.mubr.bf16.gmra.mrb[0].mxu0 %v1996
        %v2245 = vpop.f32.mrb[0].mxu0
        %v2246 = vadd.f32 %v2034, %v2245
        %v2247 = vpop.f32.mrb[0].mxu0
        %v2248 = vadd.f32 %v2038, %v2247
        %v2249 = vpop.f32.mrb[0].mxu0
        %v2250 = vpop.f32.mrb[0].mxu0
        %2251 = vdwg.mxu0
        %2252 = vmatprep.subr.bf16.mxu0 %v2150
        %2253 = vmatpush1.bf16.msra.mxu0 %v2149
        %2254 = vmatprep.subr.bf16.mxu0 %v2154
        %2255 = vmatpush1.bf16.msra.mxu0 %v2153
        %2256 = vmatprep.subr.bf16.mxu0 %v2158
        %2257 = vmatpush1.bf16.msra.mxu0 %v2157
        %2258 = vmatprep.subr.bf16.mxu0 %v2162
        %2259 = vmatpush1.bf16.msra.mxu0 %v2161
        %2260 = vmatprep.subr.bf16.mxu0 %v2166
        %2261 = vmatpush1.bf16.msra.mxu0 %v2165
        %2262 = vmatprep.subr.bf16.mxu0 %v2170
        %2263 = vmatpush1.bf16.msra.mxu0 %v2169
        %2264 = vmatprep.subr.bf16.mxu0 %v2174
        %2265 = vmatpush1.bf16.msra.mxu0 %v2173
        %2266 = vmatprep.subr.bf16.mxu0 %v2178
        %2267 = vmatpush1.bf16.msra.mxu0 %v2177
        %2268 = vmatprep.subr.bf16.mxu0 0
        %2269 = vmatpush1.bf16.msra.mxu0 0
        %2270 = vmatprep.subr.bf16.mxu0 0
        %2271 = vmatpush1.bf16.msra.mxu0 0
        %2272 = vmatprep.subr.bf16.mxu0 0
        %2273 = vmatpush1.bf16.msra.mxu0 0
        %2274 = vmatprep.subr.bf16.mxu0 0
        %2275 = vmatpush1.bf16.msra.mxu0 0
        %2276 = vmatprep.subr.bf16.mxu0 0
        %2277 = vmatpush1.bf16.msra.mxu0 0
        %2278 = vmatprep.subr.bf16.mxu0 0
        %2279 = vmatpush1.bf16.msra.mxu0 0
        %2280 = vmatprep.subr.bf16.mxu0 0
        %2281 = vmatpush1.bf16.msra.mxu0 0
        %2282 = vmatprep.subr.bf16.mxu0 0
        %2283 = vmatpush1.bf16.msra.mxu0 0
        %2284 = vmatprep.mubr.bf16.mxu0 0
        %2285 = vmatmul.mubr.bf16.gmra.mrb[0].mxu0 %v1996
        %v2286 = vpop.f32.mrb[0].mxu0
        %v2287 = vadd.f32 %v2042, %v2286
        %v2288 = vpop.f32.mrb[0].mxu0
        %v2289 = vadd.f32 %v2046, %v2288
        %v2290 = vpop.f32.mrb[0].mxu0
        %v2291 = vpop.f32.mrb[0].mxu0
        %2292 = vdwg.mxu0
        %v2293 = vmul.f32 %v2246, 0.5
        %v2294 = vmul.f32 %v2248, 0.5
        %v2295 = vmul.f32 %v2287, 0.5
        %v2296 = vmul.f32 %v2289, 0.5
        %v2297 = vmul.f32 %v2246, %v2246
        %v2298 = vmul.f32 %v2248, %v2248
        %v2299 = vmul.f32 %v2287, %v2287
        %v2300 = vmul.f32 %v2289, %v2289
        %v2301 = vmul.f32 %v2246, %v2297
        %v2302 = vmul.f32 %v2248, %v2298
        %v2303 = vmul.f32 %v2287, %v2299
        %v2304 = vmul.f32 %v2289, %v2300
        %v2305 = vmul.f32 %v2301, 0.044715
        %v2306 = vmul.f32 %v2302, 0.044715
        %v2307 = vmul.f32 %v2303, 0.044715
        %v2308 = vmul.f32 %v2304, 0.044715
        %v2309 = vadd.f32 %v2246, %v2305
        %v2310 = vadd.f32 %v2248, %v2306
        %v2311 = vadd.f32 %v2287, %v2307
        %v2312 = vadd.f32 %v2289, %v2308
        %v2313 = vmul.f32 %v2309, 0.7978846
        %v2314 = vmul.f32 %v2310, 0.7978846
        %v2315 = vmul.f32 %v2311, 0.7978846
        %v2316 = vmul.f32 %v2312, 0.7978846
        %v2317 = vtanh.pop %v2313
        %v2318 = vtanh.pop %v2314
        %v2319 = vtanh.pop %v2315
        %v2320 = vtanh.pop %v2316
        %v2321 = vadd.f32 %v2317, 1.0
        %v2322 = vadd.f32 %v2318, 1.0
        %v2323 = vadd.f32 %v2319, 1.0
        %v2324 = vadd.f32 %v2320, 1.0
        %v2325 = vmul.f32 %v2293, %v2321
        %v2326 = vmul.f32 %v2294, %v2322
        %v2327 = vmul.f32 %v2295, %v2323
        %v2328 = vmul.f32 %v2296, %v2324
        %v2329 = vpack.c.bf16 %v2325, %v2325
        %v2330 = vpack.c.bf16 %v2326, %v2326
        %v2331 = vpack.c.bf16 %v2327, %v2327
        %v2332 = vpack.c.bf16 %v2328, %v2328
        %v2333 = vld [vmem:[#allocation13] sm:$0xf]
        %v2334 = vld [vmem:[#allocation13 + $0x4] sm:$0xf]
        %v2335 = vld [vmem:[#allocation13 + $0x8] sm:$0xf]
        %v2336 = vld [vmem:[#allocation13 + $0xc] sm:$0xf]
        %v2337 = vld [vmem:[#allocation13 + $0x10] sm:$0xf]
        %v2338 = vld [vmem:[#allocation13 + $0x14] sm:$0xf]
        %v2339 = vld [vmem:[#allocation13 + $0x18] sm:$0xf]
        %v2340 = vld [vmem:[#allocation13 + $0x1c] sm:$0xf]
        %v2341 = vld [vmem:[#allocation13 + $0x20] sm:$0xf]
        %v2342 = vld [vmem:[#allocation13 + $0x24] sm:$0xf]
        %v2343 = vld [vmem:[#allocation13 + $0x28] sm:$0xf]
        %v2344 = vld [vmem:[#allocation13 + $0x2c] sm:$0xf]
        %v2345 = vld [vmem:[#allocation13 + $0x30] sm:$0xf]
        %v2346 = vld [vmem:[#allocation13 + $0x34] sm:$0xf]
        %v2347 = vld [vmem:[#allocation13 + $0x38] sm:$0xf]
        %v2348 = vld [vmem:[#allocation13 + $0x3c] sm:$0xf]
        %v2349 = vld [vmem:[#allocation13 + $0x40] sm:$0xf]
        %v2350 = vld [vmem:[#allocation13 + $0x44] sm:$0xf]
        %v2351 = vld [vmem:[#allocation13 + $0x48] sm:$0xf]
        %v2352 = vld [vmem:[#allocation13 + $0x4c] sm:$0xf]
        %v2353 = vld [vmem:[#allocation13 + $0x50] sm:$0xf]
        %v2354 = vld [vmem:[#allocation13 + $0x54] sm:$0xf]
        %v2355 = vld [vmem:[#allocation13 + $0x58] sm:$0xf]
        %v2356 = vld [vmem:[#allocation13 + $0x5c] sm:$0xf]
        %v2357 = vld [vmem:[#allocation13 + $0x60] sm:$0xf]
        %v2358 = vld [vmem:[#allocation13 + $0x64] sm:$0xf]
        %v2359 = vld [vmem:[#allocation13 + $0x68] sm:$0xf]
        %v2360 = vld [vmem:[#allocation13 + $0x6c] sm:$0xf]
        %v2361 = vld [vmem:[#allocation13 + $0x70] sm:$0xf]
        %v2362 = vld [vmem:[#allocation13 + $0x74] sm:$0xf]
        %v2363 = vld [vmem:[#allocation13 + $0x78] sm:$0xf]
        %v2364 = vld [vmem:[#allocation13 + $0x7c] sm:$0xf]
        %v2365 = vld [vmem:[#allocation13 + $0x80] sm:$0xf]
        %v2366 = vld [vmem:[#allocation13 + $0x84] sm:$0xf]
        %v2367 = vld [vmem:[#allocation13 + $0x88] sm:$0xf]
        %v2368 = vld [vmem:[#allocation13 + $0x8c] sm:$0xf]
        %v2369 = vld [vmem:[#allocation13 + $0x90] sm:$0xf]
        %v2370 = vld [vmem:[#allocation13 + $0x94] sm:$0xf]
        %v2371 = vld [vmem:[#allocation13 + $0x98] sm:$0xf]
        %v2372 = vld [vmem:[#allocation13 + $0x9c] sm:$0xf]
        %v2373 = vld [vmem:[#allocation13 + $0xa0] sm:$0xf]
        %v2374 = vld [vmem:[#allocation13 + $0xa4] sm:$0xf]
        %v2375 = vld [vmem:[#allocation13 + $0xa8] sm:$0xf]
        %v2376 = vld [vmem:[#allocation13 + $0xac] sm:$0xf]
        %v2377 = vld [vmem:[#allocation13 + $0xb0] sm:$0xf]
        %v2378 = vld [vmem:[#allocation13 + $0xb4] sm:$0xf]
        %v2379 = vld [vmem:[#allocation13 + $0xb8] sm:$0xf]
        %v2380 = vld [vmem:[#allocation13 + $0xbc] sm:$0xf]
        %v2381 = vld [vmem:[#allocation13 + $0xc0] sm:$0xf]
        %v2382 = vld [vmem:[#allocation13 + $0xc4] sm:$0xf]
        %v2383 = vld [vmem:[#allocation13 + $0xc8] sm:$0xf]
        %v2384 = vld [vmem:[#allocation13 + $0xcc] sm:$0xf]
        %v2385 = vld [vmem:[#allocation13 + $0xd0] sm:$0xf]
        %v2386 = vld [vmem:[#allocation13 + $0xd4] sm:$0xf]
        %v2387 = vld [vmem:[#allocation13 + $0xd8] sm:$0xf]
        %v2388 = vld [vmem:[#allocation13 + $0xdc] sm:$0xf]
        %v2389 = vld [vmem:[#allocation13 + $0xe0] sm:$0xf]
        %v2390 = vld [vmem:[#allocation13 + $0xe4] sm:$0xf]
        %v2391 = vld [vmem:[#allocation13 + $0xe8] sm:$0xf]
        %v2392 = vld [vmem:[#allocation13 + $0xec] sm:$0xf]
        %v2393 = vld [vmem:[#allocation13 + $0xf0] sm:$0xf]
        %v2394 = vld [vmem:[#allocation13 + $0xf4] sm:$0xf]
        %v2395 = vld [vmem:[#allocation13 + $0xf8] sm:$0xf]
        %v2396 = vld [vmem:[#allocation13 + $0xfc] sm:$0xf]
        %v2397 = vld [vmem:[%s12] sm:$0x1]
        %v2399 = vlaneseq
        %v2400 = vshrl.u32 %v2399, 7
        %v2401 = vsub.s32 0, %v2400
        %v2402 = vrot.slane %v2397, %v2401
        %v2468 = vunpack.c.l.b16 %v2333
        %v2469 = vunpack.c.l.b16 %v2334
        %v2470 = vunpack.c.l.b16 %v2335
        %v2471 = vunpack.c.l.b16 %v2336
        %v2472 = vunpack.c.l.b16 %v2337
        %v2473 = vunpack.c.l.b16 %v2338
        %v2474 = vunpack.c.l.b16 %v2339
        %v2475 = vunpack.c.l.b16 %v2340
        %v2476 = vunpack.c.l.b16 %v2341
        %v2477 = vunpack.c.l.b16 %v2342
        %v2478 = vunpack.c.l.b16 %v2343
        %v2479 = vunpack.c.l.b16 %v2344
        %v2480 = vunpack.c.l.b16 %v2345
        %v2481 = vunpack.c.l.b16 %v2346
        %v2482 = vunpack.c.l.b16 %v2347
        %v2483 = vunpack.c.l.b16 %v2348
        %v2484 = vunpack.c.l.b16 %v2349
        %v2485 = vunpack.c.l.b16 %v2350
        %v2486 = vunpack.c.l.b16 %v2351
        %v2487 = vunpack.c.l.b16 %v2352
        %v2488 = vunpack.c.l.b16 %v2353
        %v2489 = vunpack.c.l.b16 %v2354
        %v2490 = vunpack.c.l.b16 %v2355
        %v2491 = vunpack.c.l.b16 %v2356
        %v2492 = vunpack.c.l.b16 %v2357
        %v2493 = vunpack.c.l.b16 %v2358
        %v2494 = vunpack.c.l.b16 %v2359
        %v2495 = vunpack.c.l.b16 %v2360
        %v2496 = vunpack.c.l.b16 %v2361
        %v2497 = vunpack.c.l.b16 %v2362
        %v2498 = vunpack.c.l.b16 %v2363
        %v2499 = vunpack.c.l.b16 %v2364
        %v2500 = vunpack.c.l.b16 %v2365
        %v2501 = vunpack.c.l.b16 %v2366
        %v2502 = vunpack.c.l.b16 %v2367
        %v2503 = vunpack.c.l.b16 %v2368
        %v2504 = vunpack.c.l.b16 %v2369
        %v2505 = vunpack.c.l.b16 %v2370
        %v2506 = vunpack.c.l.b16 %v2371
        %v2507 = vunpack.c.l.b16 %v2372
        %v2508 = vunpack.c.l.b16 %v2373
        %v2509 = vunpack.c.l.b16 %v2374
        %v2510 = vunpack.c.l.b16 %v2375
        %v2511 = vunpack.c.l.b16 %v2376
        %v2512 = vunpack.c.l.b16 %v2377
        %v2513 = vunpack.c.l.b16 %v2378
        %v2514 = vunpack.c.l.b16 %v2379
        %v2515 = vunpack.c.l.b16 %v2380
        %v2516 = vunpack.c.l.b16 %v2381
        %v2517 = vunpack.c.l.b16 %v2382
        %v2518 = vunpack.c.l.b16 %v2383
        %v2519 = vunpack.c.l.b16 %v2384
        %v2520 = vunpack.c.l.b16 %v2385
        %v2521 = vunpack.c.l.b16 %v2386
        %v2522 = vunpack.c.l.b16 %v2387
        %v2523 = vunpack.c.l.b16 %v2388
        %v2524 = vunpack.c.l.b16 %v2389
        %v2525 = vunpack.c.l.b16 %v2390
        %v2526 = vunpack.c.l.b16 %v2391
        %v2527 = vunpack.c.l.b16 %v2392
        %v2528 = vunpack.c.l.b16 %v2393
        %v2529 = vunpack.c.l.b16 %v2394
        %v2530 = vunpack.c.l.b16 %v2395
        %v2531 = vunpack.c.l.b16 %v2396
        %v2532 = vpack.c.b16 %v2469, %v2468
        %v2533 = vpack.c.b16 %v2471, %v2470
        %v2534 = vpack.c.b16 %v2473, %v2472
        %v2535 = vpack.c.b16 %v2475, %v2474
        %v2536 = vpack.c.b16 %v2477, %v2476
        %v2537 = vpack.c.b16 %v2479, %v2478
        %v2538 = vpack.c.b16 %v2481, %v2480
        %v2539 = vpack.c.b16 %v2483, %v2482
        %v2540 = vpack.c.b16 %v2485, %v2484
        %v2541 = vpack.c.b16 %v2487, %v2486
        %v2542 = vpack.c.b16 %v2489, %v2488
        %v2543 = vpack.c.b16 %v2491, %v2490
        %v2544 = vpack.c.b16 %v2493, %v2492
        %v2545 = vpack.c.b16 %v2495, %v2494
        %v2546 = vpack.c.b16 %v2497, %v2496
        %v2547 = vpack.c.b16 %v2499, %v2498
        %v2548 = vpack.c.b16 %v2501, %v2500
        %v2549 = vpack.c.b16 %v2503, %v2502
        %v2550 = vpack.c.b16 %v2505, %v2504
        %v2551 = vpack.c.b16 %v2507, %v2506
        %v2552 = vpack.c.b16 %v2509, %v2508
        %v2553 = vpack.c.b16 %v2511, %v2510
        %v2554 = vpack.c.b16 %v2513, %v2512
        %v2555 = vpack.c.b16 %v2515, %v2514
        %v2556 = vpack.c.b16 %v2517, %v2516
        %v2557 = vpack.c.b16 %v2519, %v2518
        %v2558 = vpack.c.b16 %v2521, %v2520
        %v2559 = vpack.c.b16 %v2523, %v2522
        %v2560 = vpack.c.b16 %v2525, %v2524
        %v2561 = vpack.c.b16 %v2527, %v2526
        %v2562 = vpack.c.b16 %v2529, %v2528
        %v2563 = vpack.c.b16 %v2531, %v2530
        %2596 = vmatprep.subr.bf16.mxu0 0
        %2597 = vmatpush1.bf16.msra.mxu0 %v2532
        %2598 = vmatprep.subr.bf16.mxu0 0
        %2599 = vmatpush1.bf16.msra.mxu0 %v2533
        %2600 = vmatprep.subr.bf16.mxu0 0
        %2601 = vmatpush1.bf16.msra.mxu0 %v2534
        %2602 = vmatprep.subr.bf16.mxu0 0
        %2603 = vmatpush1.bf16.msra.mxu0 %v2535
        %2604 = vmatprep.subr.bf16.mxu0 0
        %2605 = vmatpush1.bf16.msra.mxu0 %v2536
        %2606 = vmatprep.subr.bf16.mxu0 0
        %2607 = vmatpush1.bf16.msra.mxu0 %v2537
        %2608 = vmatprep.subr.bf16.mxu0 0
        %2609 = vmatpush1.bf16.msra.mxu0 %v2538
        %2610 = vmatprep.subr.bf16.mxu0 0
        %2611 = vmatpush1.bf16.msra.mxu0 %v2539
        %2612 = vmatprep.subr.bf16.mxu0 0
        %2613 = vmatpush1.bf16.msra.mxu0 %v2540
        %2614 = vmatprep.subr.bf16.mxu0 0
        %2615 = vmatpush1.bf16.msra.mxu0 %v2541
        %2616 = vmatprep.subr.bf16.mxu0 0
        %2617 = vmatpush1.bf16.msra.mxu0 %v2542
        %2618 = vmatprep.subr.bf16.mxu0 0
        %2619 = vmatpush1.bf16.msra.mxu0 %v2543
        %2620 = vmatprep.subr.bf16.mxu0 0
        %2621 = vmatpush1.bf16.msra.mxu0 %v2544
        %2622 = vmatprep.subr.bf16.mxu0 0
        %2623 = vmatpush1.bf16.msra.mxu0 %v2545
        %2624 = vmatprep.subr.bf16.mxu0 0
        %2625 = vmatpush1.bf16.msra.mxu0 %v2546
        %2626 = vmatprep.subr.bf16.mxu0 0
        %2627 = vmatpush1.bf16.msra.mxu0 %v2547
        %2628 = vmatprep.mubr.bf16.mxu0 %v2330
        %2629 = vmatmul.mubr.bf16.gmra.mrb[0].mxu0 %v2329
        %v2630 = vpop.f32.mrb[0].mxu0
        %v2631 = vadd.f32 %v2402, %v2630
        %v2632 = vpop.f32.mrb[0].mxu0
        %v2633 = vpop.f32.mrb[0].mxu0
        %v2634 = vpop.f32.mrb[0].mxu0
        %2635 = vdwg.mxu0
        %2636 = vmatprep.subr.bf16.mxu0 0
        %2637 = vmatpush1.bf16.msra.mxu0 %v2548
        %2638 = vmatprep.subr.bf16.mxu0 0
        %2639 = vmatpush1.bf16.msra.mxu0 %v2549
        %2640 = vmatprep.subr.bf16.mxu0 0
        %2641 = vmatpush1.bf16.msra.mxu0 %v2550
        %2642 = vmatprep.subr.bf16.mxu0 0
        %2643 = vmatpush1.bf16.msra.mxu0 %v2551
        %2644 = vmatprep.subr.bf16.mxu0 0
        %2645 = vmatpush1.bf16.msra.mxu0 %v2552
        %2646 = vmatprep.subr.bf16.mxu0 0
        %2647 = vmatpush1.bf16.msra.mxu0 %v2553
        %2648 = vmatprep.subr.bf16.mxu0 0
        %2649 = vmatpush1.bf16.msra.mxu0 %v2554
        %2650 = vmatprep.subr.bf16.mxu0 0
        %2651 = vmatpush1.bf16.msra.mxu0 %v2555
        %2652 = vmatprep.subr.bf16.mxu0 0
        %2653 = vmatpush1.bf16.msra.mxu0 %v2556
        %2654 = vmatprep.subr.bf16.mxu0 0
        %2655 = vmatpush1.bf16.msra.mxu0 %v2557
        %2656 = vmatprep.subr.bf16.mxu0 0
        %2657 = vmatpush1.bf16.msra.mxu0 %v2558
        %2658 = vmatprep.subr.bf16.mxu0 0
        %2659 = vmatpush1.bf16.msra.mxu0 %v2559
        %2660 = vmatprep.subr.bf16.mxu0 0
        %2661 = vmatpush1.bf16.msra.mxu0 %v2560
        %2662 = vmatprep.subr.bf16.mxu0 0
        %2663 = vmatpush1.bf16.msra.mxu0 %v2561
        %2664 = vmatprep.subr.bf16.mxu0 0
        %2665 = vmatpush1.bf16.msra.mxu0 %v2562
        %2666 = vmatprep.subr.bf16.mxu0 0
        %2667 = vmatpush1.bf16.msra.mxu0 %v2563
        %2668 = vmatprep.mubr.bf16.mxu0 %v2332
        %2669 = vmatmul.mubr.bf16.gmra.mrb[0].mxu0 %v2331
        %v2670 = vpop.f32.mrb[0].mxu0
        %v2671 = vadd.f32 %v2631, %v2670
        %v2672 = vpop.f32.mrb[0].mxu0
        %v2673 = vpop.f32.mrb[0].mxu0
        %v2674 = vpop.f32.mrb[0].mxu0
        %2675 = vdwg.mxu0
        %v2676 = vadd.f32 %v1968, %v2671
        %2677 = vst [vmem:[%s538] sm:$0xff] %v2676
        %s2678 = sand.u32 %s319, 1
        %s2679 = scalar_lea.sflag [#allocation4], %s2678
        %s2680 = sand.u32 %s319, 1
        %s2681 = smul.addr %s2680, 8
        %s2682 = scalar_lea.vmem [#allocation14], %s2681
        // Predicated region
        $region101: #{tpu_custom_call.1} parent=71 // pred_check
          %p2683 = pneg %p329
        $region102: #{tpu_custom_call.1} parent=71 // pred_check_branch
          %2685 = sbr.rel (%p2683) target = $region104
        $region103: #{tpu_custom_call.1} parent=71 // pred_region
          %s2687 = ssub.s32 128, 128
          %2688 = vsyncadd %s2679, %s2687
          %s2689 = smul.addr %s33, 128
          %s2690 = scalar_lea.hbm %s13, %s2689
          %s2692 = sshll.u32 %s2682, 4
          %s2693 = int_to_ptr.vmem [resolvable:$true] %s2692
          %2695 = dma.vmem_to_hbm [thread:$0]  %s2693, 128, %s2690, %s2679
        $region104: #{tpu_custom_call.1} parent=71 // pred_fallthru
          _
      $region72: #{tpu_custom_call.1} parent=5 // pred_fallthru
        _
      %p2696 = scmp.le.s32.totalorder 2, %s28
      // Predicated region
      $region105: #{tpu_custom_call.1} parent=5 // pred_check
        %p2697 = pneg %p2696
      $region106: #{tpu_custom_call.1} parent=5 // pred_check_branch
        %2699 = sbr.rel (%p2697) target = $region108
      $region107: #{tpu_custom_call.1} parent=5 // pred_region
        %s2700 = ssub.s32 %s28, 2
        // Predicated region
        $region109: #{tpu_custom_call.1} parent=107 // pred_check
          %p2701 = pneg %p335
        $region110: #{tpu_custom_call.1} parent=107 // pred_check_branch
          %2703 = sbr.rel (%p2701) target = $region112
        $region111: #{tpu_custom_call.1} parent=107 // pred_region
          %s2704 = sand.u32 %s320, 1
          %s2705 = scalar_lea.sflag [#allocation4], %s2704
          %s2706 = sand.u32 %s320, 1
          %s2707 = smul.addr %s2706, 8
          %s2708 = scalar_lea.vmem [#allocation14], %s2707
          %2709 = dma.done %s2705, 128
        $region112: #{tpu_custom_call.1} parent=107 // pred_fallthru
          _
      $region108: #{tpu_custom_call.1} parent=5 // pred_fallthru
        _
    $region6: #{tpu_custom_call.1} parent=1 // loop_footer
      %s32 = sadd.s32 1, %s28
    $region7: #{tpu_custom_call.1} parent=1 // loop_footer_branch
      %27 = sbr.rel target = $region3
    $region8: #{tpu_custom_call.1} parent=1 // loop_exit
      _
    %2710 = vsyncpa [#allocation3], 1
    %s2711 = scalar_lea.sflag [#allocation3], 1
    %2712 = vsyncpa %s2711, 1
    %2713 = vsyncpa [#allocation6], 1
    %2714 = vsyncpa [#allocation9], 1
    %2715 = vsyncpa [#allocation12], 1
    %2716 = vsyncpa [#allocation4], 1
    %s2717 = scalar_lea.sflag [#allocation4], 1
    %2718 = vsyncpa %s2717, 1

</llo_original>
